<compile_context>
chip_gen: v6e
topology: v6e:2x2x1
jax: 0.10.0
libtpu: 0.0.40
codegen_flags: <defaults>
</compile_context>

<pallas_src>
import functools
import math

import jax
import jax.numpy as jnp
from jax import lax
from jax.experimental import pallas as pl
from jax.experimental.pallas import tpu as pltpu

EPS = 1e-5


# --------------------------------- kernel -----------------------------------
def self_attention_kernel(x_ref, gsum_ref, gnw_ref, gnb_ref, wq_ref, wk_ref, wv_ref,
                          wout_ref, bout_ref, o_ref,
                          qs_ref, ks_ref, vs_ref, ao_ref, *, n_head):
    C, S = x_ref.shape
    tq = o_ref.shape[-1]
    hd = C // n_head
    qi = pl.program_id(1)

    # ---- per-image prologue: GroupNorm + q/k/v projections -> bf16 scratch ----
    @pl.when(qi == 0)
    def _():
        x = x_ref[...]                                           # (C, S) f32
        sum_s = jnp.sum(x, axis=1, keepdims=True)                # (C, 1) lane reduce
        mean_c = jnp.dot(gsum_ref[...], sum_s,
                         preferred_element_type=jnp.float32)     # (C, 1) tiny group matmul
        xc = x - mean_c
        ssq = jnp.sum(xc * xc, axis=1, keepdims=True)            # (C, 1)
        var_c = jnp.dot(gsum_ref[...], ssq,
                        preferred_element_type=jnp.float32)
        xn = xc * lax.rsqrt(var_c + EPS) * gnw_ref[...] + gnb_ref[...]
        # Split projections; cast to bf16 immediately (attention-scale folded into wq).
        qs_ref[...] = jnp.dot(wq_ref[...], xn,
                              preferred_element_type=jnp.float32).astype(jnp.bfloat16)
        ks_ref[...] = jnp.dot(wk_ref[...], xn,
                              preferred_element_type=jnp.float32).astype(jnp.bfloat16)
        vs_ref[...] = jnp.dot(wv_ref[...], xn,
                              preferred_element_type=jnp.float32).astype(jnp.bfloat16)

    # ---- attention for this query block (tq spatial columns) ----
    q0 = pl.multiple_of(qi * tq, tq)
    q_blk = qs_ref[:, pl.ds(q0, tq)]                             # (C, tq) bf16
    for h in range(n_head):
        r0 = h * hd
        k_h = ks_ref[r0:r0 + hd, :]                              # (hd, S) bf16
        v_h = vs_ref[r0:r0 + hd, :]                              # (hd, S) bf16
        # logits[i, j] = sum_c q[c, q0+i] * k[c, j]  (contract head dim of both)
        logits = lax.dot_general(q_blk[r0:r0 + hd, :], k_h,
                                 (((0,), (0,)), ((), ())),
                                 preferred_element_type=jnp.float32)     # (tq, S)
        logits = logits - jnp.max(logits, axis=-1, keepdims=True)
        p = jnp.exp(logits)
        p = p * pl.reciprocal(jnp.sum(p, axis=-1, keepdims=True), approx=True)
        # ao[c, i] = sum_j p[i, j] * v[c, j]  -> channel-major (hd, tq), stored to scratch
        ao_ref[r0:r0 + hd, :] = lax.dot_general(
            v_h, p.astype(jnp.bfloat16), (((1,), (1,)), ((), ())),
            preferred_element_type=jnp.float32)

    # ---- out projection (depthwise scale/bias folded) + residual ----
    y = (jnp.dot(wout_ref[...], ao_ref[...], preferred_element_type=jnp.float32)
         + bout_ref[...] + x_ref[:, pl.ds(q0, tq)])
    o_ref[...] = y.astype(o_ref.dtype)                           # lane-dense (C, tq) store


# -------------------------------- wrapper ------------------------------------
def self_attention(x_nchw, params, *, n_head=1, norm_groups=32):
    """Pallas TPU forward for SelfAttention. x: (B, C, H, W) -> (B, C, H, W)."""
    B, C, H, W = x_nchw.shape
    assert C % n_head == 0 and C % norm_groups == 0
    S = H * W
    hd = C // n_head

    x = x_nchw.reshape(B, C, S).astype(jnp.float32)     # pure view: no transpose needed

    # Query-block width: lane-dense multiple of 128 (256 at large S for MXU fill).
    if S % 256 == 0 and S > 256:
        tq = 256
    elif S % 128 == 0:
        tq = 128
    else:
        tq = S   # TODO(synk): non-128-multiple spatial sizes fall back to a single block
    nq = S // tq

    # Block-diagonal group-sum matrix; only ever multiplies (C, 1) per-channel sums.
    grp = jnp.arange(C, dtype=jnp.int32) // (C // norm_groups)
    gsum = (grp[:, None] == grp[None, :]).astype(jnp.float32) / float((C // norm_groups) * S)

    # Fold depthwise 1x1 convs, the 1/sqrt(C) attention scale and out-conv biases.
    scale = 1.0 / math.sqrt(C)
    w_eff = params["qkv_pw"].astype(jnp.float32) * params["qkv_dw"].astype(jnp.float32)[None, :]
    w3 = w_eff.reshape(n_head, 3, hd, C)                 # per-head [q | k | v] channel blocks
    w_q = (w3[:, 0] * scale).reshape(C, C)               # heads contiguous, scale folded
    w_k = w3[:, 1].reshape(C, C)
    w_v = w3[:, 2].reshape(C, C)

    w_out = params["out_pw_w"].astype(jnp.float32) * params["out_dw_w"].astype(jnp.float32)[None, :]
    b_out = (params["out_pw_w"].astype(jnp.float32) @ params["out_dw_b"].astype(jnp.float32)
             + params["out_pw_b"].astype(jnp.float32)).reshape(C, 1)
    gn_w = params["gn_w"].astype(jnp.float32).reshape(C, 1)
    gn_b = params["gn_b"].astype(jnp.float32).reshape(C, 1)

    def const(shp):
        return pl.BlockSpec(shp, lambda b, q: (0,) * len(shp))

    # Explicit VMEM budget: bf16 q/k/v scratch + ao scratch + double-buffered x/out
    # blocks + weights, with headroom (v5e scoped default is only 16 MiB).
    need = (3 * C * S * 2 + C * tq * 4
            + 2 * (C * S * 4 + C * tq * 4 + (5 * C * C + 4 * C) * 4))
    vmem_limit = int(min(max(2 * need, 32 * 1024 * 1024), 64 * 1024 * 1024))

    out = pl.pallas_call(
        functools.partial(self_attention_kernel, n_head=n_head),
        out_shape=jax.ShapeDtypeStruct((B, C, S), jnp.float32),
        grid=(B, nq),
        in_specs=[
            pl.BlockSpec((None, C, S), lambda b, q: (b, 0, 0)),   # x (C-major, S on lanes)
            const((C, C)),                                        # gsum (GroupNorm groups)
            const((C, 1)),                                        # gn_w
            const((C, 1)),                                        # gn_b
            const((C, C)),                                        # w_q (dw + 1/sqrt(C) folded)
            const((C, C)),                                        # w_k (dw folded)
            const((C, C)),                                        # w_v (dw folded)
            const((C, C)),                                        # w_out (dw folded)
            const((C, 1)),                                        # b_out (dw bias folded)
        ],
        out_specs=pl.BlockSpec((None, C, tq), lambda b, q: (b, 0, q)),
        scratch_shapes=[
            pltpu.VMEM((C, S), jnp.bfloat16),      # Q (all heads, bf16, persists over qi)
            pltpu.VMEM((C, S), jnp.bfloat16),      # K
            pltpu.VMEM((C, S), jnp.bfloat16),      # V
            pltpu.VMEM((C, tq), jnp.float32),      # per-block attention output
        ],
        compiler_params=pltpu.CompilerParams(
            dimension_semantics=("parallel", "arbitrary"),
            vmem_limit_bytes=vmem_limit),
    )(x, gsum, gn_w, gn_b, w_q, w_k, w_v, w_out, b_out)
    return out.reshape(B, C, H, W)


# ------------------------ pure-JAX reference (NCHW) ---------------------------
def self_attention_ref(x, p, *, n_head, norm_groups):
    B, C, H, W = x.shape
    hd = C // n_head
    xg = x.reshape(B, norm_groups, C // norm_groups, H, W)
    mu = xg.mean(axis=(2, 3, 4), keepdims=True)
    var = xg.var(axis=(2, 3, 4), keepdims=True)
    xn = ((xg - mu) / jnp.sqrt(var + EPS)).reshape(B, C, H, W)
    xn = xn * p["gn_w"].reshape(1, C, 1, 1) + p["gn_b"].reshape(1, C, 1, 1)

    qkv = jnp.einsum("oc,bchw->bohw", p["qkv_pw"],
                     xn * p["qkv_dw"].reshape(1, C, 1, 1))
    qkv = qkv.reshape(B, n_head, 3 * hd, H, W)
    q, k, v = qkv[:, :, :hd], qkv[:, :, hd:2 * hd], qkv[:, :, 2 * hd:]
    attn = jnp.einsum("bnchw,bncyx->bnhwyx", q, k) / math.sqrt(C)
    attn = jax.nn.softmax(attn.reshape(B, n_head, H, W, H * W), axis=-1)
    attn = attn.reshape(B, n_head, H, W, H, W)
    out = jnp.einsum("bnhwyx,bncyx->bnchw", attn, v).reshape(B, C, H, W)

    out = out * p["out_dw_w"].reshape(1, C, 1, 1) + p["out_dw_b"].reshape(1, C, 1, 1)
    out = jnp.einsum("oc,bchw->bohw", p["out_pw_w"], out) + p["out_pw_b"].reshape(1, C, 1, 1)
    return out + x


# ------------------------------- param init ----------------------------------
def init_params(key, C):
    ks = jax.random.split(key, 8)
    n = lambda k, shp, s: jax.random.normal(k, shp, jnp.float32) * s
    return {
        "gn_w":     1.0 + n(ks[0], (C,), 0.1),          # GroupNorm affine
        "gn_b":     n(ks[1], (C,), 0.1),
        "qkv_dw":   1.0 + n(ks[2], (C,), 0.2),          # Conv2d(C,C,1,groups=C,bias=False)
        "qkv_pw":   n(ks[3], (3 * C, C), 0.3),          # Conv2d(C,3C,1,bias=False)
        "out_dw_w": 1.0 + n(ks[4], (C,), 0.2),          # Conv2d(C,C,1,groups=C) weight
        "out_dw_b": n(ks[5], (C,), 0.1),                # Conv2d(C,C,1,groups=C) bias
        "out_pw_w": n(ks[6], (C, C), 0.3),              # Conv2d(C,C,1) weight
        "out_pw_b": n(ks[7], (C,), 0.1),                # Conv2d(C,C,1) bias
    }


if __name__ == "__main__":
    B, C, H, W = 2, 32, 16, 16
    n_head, norm_groups = 2, 8

    key = jax.random.PRNGKey(0)
    kx, kp = jax.random.split(key)
    x = jax.random.normal(kx, (B, C, H, W), jnp.float32)      # NCHW like PyTorch
    params = init_params(kp, C)

    out = jax.block_until_ready(
        self_attention(x, params, n_head=n_head, norm_groups=norm_groups))
    assert out.shape == (B, C, H, W)

    ref = jax.block_until_ready(
        self_attention_ref(x, params, n_head=n_head, norm_groups=norm_groups))
    err = float(jnp.max(jnp.abs(out - ref)) / (jnp.max(jnp.abs(ref)) + 1e-6))
    assert err < 2e-2, f"mismatch vs reference: rel max err {err}"

    print("KERNEL_OK")
</pallas_src>

<mosaic_0001>
module attributes {stable_mosaic.version = 11 : i64} {
  func.func @self_attention_kernel(%arg0: i32, %arg1: i32, %arg2: memref<1x32x256xf32, #tpu.memory_space<vmem>>, %arg3: memref<32x32xf32, #tpu.memory_space<vmem>>, %arg4: memref<32x1xf32, #tpu.memory_space<vmem>>, %arg5: memref<32x1xf32, #tpu.memory_space<vmem>>, %arg6: memref<32x32xf32, #tpu.memory_space<vmem>>, %arg7: memref<32x32xf32, #tpu.memory_space<vmem>>, %arg8: memref<32x32xf32, #tpu.memory_space<vmem>>, %arg9: memref<32x32xf32, #tpu.memory_space<vmem>>, %arg10: memref<32x1xf32, #tpu.memory_space<vmem>>, %arg11: memref<1x32x128xf32, #tpu.memory_space<vmem>>, %arg12: memref<32x256xbf16, #tpu.memory_space<vmem>>, %arg13: memref<32x256xbf16, #tpu.memory_space<vmem>>, %arg14: memref<32x256xbf16, #tpu.memory_space<vmem>>, %arg15: memref<32x128xf32, #tpu.memory_space<vmem>>) attributes {dimension_semantics = [#tpu.dimension_semantics<parallel>, #tpu.dimension_semantics<arbitrary>], iteration_bounds = array<i64: 2, 2>, scalar_prefetch = 0 : i64, scratch_operands = 4 : i64, tpu.core_type = #tpu.core_type<tc>, window_params = [{transform_indices = @transform_0, window_bounds = array<i64: 1, 32, 256>}, {pipeline_mode = #tpu.pipeline_mode<synchronous>, transform_indices = @transform_1, window_bounds = array<i64: 32, 32>}, {pipeline_mode = #tpu.pipeline_mode<synchronous>, transform_indices = @transform_2, window_bounds = array<i64: 32, 1>}, {pipeline_mode = #tpu.pipeline_mode<synchronous>, transform_indices = @transform_3, window_bounds = array<i64: 32, 1>}, {pipeline_mode = #tpu.pipeline_mode<synchronous>, transform_indices = @transform_4, window_bounds = array<i64: 32, 32>}, {pipeline_mode = #tpu.pipeline_mode<synchronous>, transform_indices = @transform_5, window_bounds = array<i64: 32, 32>}, {pipeline_mode = #tpu.pipeline_mode<synchronous>, transform_indices = @transform_6, window_bounds = array<i64: 32, 32>}, {pipeline_mode = #tpu.pipeline_mode<synchronous>, transform_indices = @transform_7, window_bounds = array<i64: 32, 32>}, {pipeline_mode = #tpu.pipeline_mode<synchronous>, transform_indices = @transform_8, window_bounds = array<i64: 32, 1>}, {transform_indices = @transform_9, window_bounds = array<i64: 1, 32, 128>}]} {
    %c0_i32 = arith.constant 0 : i32
    %0 = arith.cmpi eq, %arg1, %c0_i32 : i32
    %1 = arith.extui %0 : i1 to i32
    %c0_i32_0 = arith.constant 0 : i32
    %2 = arith.cmpi ne, %1, %c0_i32_0 : i32
    scf.if %2 {
      %c0_31 = arith.constant 0 : index
      %c0_32 = arith.constant 0 : index
      %c0_33 = arith.constant 0 : index
      %54 = vector.load %arg2[%c0_31, %c0_32, %c0_33] : memref<1x32x256xf32, #tpu.memory_space<vmem>>, vector<1x32x256xf32>
      %55 = vector.shape_cast %54 : vector<1x32x256xf32> to vector<32x256xf32>
      %cst_34 = arith.constant dense<0.000000e+00> : vector<32xf32>
      %56 = vector.multi_reduction <add>, %55, %cst_34 [1] : vector<32x256xf32> to vector<32xf32>
      %57 = vector.shape_cast %56 : vector<32xf32> to vector<32x1xf32>
      %c0_35 = arith.constant 0 : index
      %c0_36 = arith.constant 0 : index
      %58 = vector.load %arg3[%c0_35, %c0_36] : memref<32x32xf32, #tpu.memory_space<vmem>>, vector<32x32xf32>
      %cst_37 = arith.constant dense<0.000000e+00> : vector<32x1xf32>
      %59 = tpu.matmul %58, %57, %cst_37 {dimension_numbers = #tpu.dot_dimension_numbers<[1], [0], [0], [1], [0, 0, 1, 1], [], []>} : vector<32x32xf32>, vector<32x1xf32>, vector<32x1xf32> -> vector<32x1xf32>
      %60 = vector.broadcast %59 : vector<32x1xf32> to vector<32x256xf32>
      %61 = arith.subf %55, %60 : vector<32x256xf32>
      %62 = arith.mulf %61, %61 : vector<32x256xf32>
      %cst_38 = arith.constant dense<0.000000e+00> : vector<32xf32>
      %63 = vector.multi_reduction <add>, %62, %cst_38 [1] : vector<32x256xf32> to vector<32xf32>
      %64 = vector.shape_cast %63 : vector<32xf32> to vector<32x1xf32>
      %c0_39 = arith.constant 0 : index
      %c0_40 = arith.constant 0 : index
      %65 = vector.load %arg3[%c0_39, %c0_40] : memref<32x32xf32, #tpu.memory_space<vmem>>, vector<32x32xf32>
      %cst_41 = arith.constant dense<0.000000e+00> : vector<32x1xf32>
      %66 = tpu.matmul %65, %64, %cst_41 {dimension_numbers = #tpu.dot_dimension_numbers<[1], [0], [0], [1], [0, 0, 1, 1], [], []>} : vector<32x32xf32>, vector<32x1xf32>, vector<32x1xf32> -> vector<32x1xf32>
      %cst_42 = arith.constant 9.99999974E-6 : f32
      %67 = vector.broadcast %cst_42 : f32 to vector<32x1xf32>
      %68 = arith.addf %66, %67 : vector<32x1xf32>
      %69 = math.rsqrt %68 : vector<32x1xf32>
      %70 = vector.broadcast %69 : vector<32x1xf32> to vector<32x256xf32>
      %71 = arith.mulf %61, %70 : vector<32x256xf32>
      %c0_43 = arith.constant 0 : index
      %c0_44 = arith.constant 0 : index
      %72 = vector.load %arg4[%c0_43, %c0_44] : memref<32x1xf32, #tpu.memory_space<vmem>>, vector<32x1xf32>
      %73 = vector.broadcast %72 : vector<32x1xf32> to vector<32x256xf32>
      %74 = arith.mulf %71, %73 : vector<32x256xf32>
      %c0_45 = arith.constant 0 : index
      %c0_46 = arith.constant 0 : index
      %75 = vector.load %arg5[%c0_45, %c0_46] : memref<32x1xf32, #tpu.memory_space<vmem>>, vector<32x1xf32>
      %76 = vector.broadcast %75 : vector<32x1xf32> to vector<32x256xf32>
      %77 = arith.addf %74, %76 : vector<32x256xf32>
      %c0_47 = arith.constant 0 : index
      %c0_48 = arith.constant 0 : index
      %78 = vector.load %arg6[%c0_47, %c0_48] : memref<32x32xf32, #tpu.memory_space<vmem>>, vector<32x32xf32>
      %cst_49 = arith.constant dense<0.000000e+00> : vector<32x256xf32>
      %79 = tpu.matmul %78, %77, %cst_49 {dimension_numbers = #tpu.dot_dimension_numbers<[1], [0], [0], [1], [0, 0, 1, 1], [], []>} : vector<32x32xf32>, vector<32x256xf32>, vector<32x256xf32> -> vector<32x256xf32>
      %80 = arith.truncf %79 : vector<32x256xf32> to vector<32x256xbf16>
      %c0_50 = arith.constant 0 : index
      %c0_51 = arith.constant 0 : index
      %81 = vector.load %arg12[%c0_50, %c0_51] : memref<32x256xbf16, #tpu.memory_space<vmem>>, vector<32x256xbf16>
      tpu.vector_store %arg12[%c0_50, %c0_51], %80 {strides = array<i32>} : memref<32x256xbf16, #tpu.memory_space<vmem>>, vector<32x256xbf16>,
      %c0_52 = arith.constant 0 : index
      %c0_53 = arith.constant 0 : index
      %82 = vector.load %arg7[%c0_52, %c0_53] : memref<32x32xf32, #tpu.memory_space<vmem>>, vector<32x32xf32>
      %cst_54 = arith.constant dense<0.000000e+00> : vector<32x256xf32>
      %83 = tpu.matmul %82, %77, %cst_54 {dimension_numbers = #tpu.dot_dimension_numbers<[1], [0], [0], [1], [0, 0, 1, 1], [], []>} : vector<32x32xf32>, vector<32x256xf32>, vector<32x256xf32> -> vector<32x256xf32>
      %84 = arith.truncf %83 : vector<32x256xf32> to vector<32x256xbf16>
      %c0_55 = arith.constant 0 : index
      %c0_56 = arith.constant 0 : index
      %85 = vector.load %arg13[%c0_55, %c0_56] : memref<32x256xbf16, #tpu.memory_space<vmem>>, vector<32x256xbf16>
      tpu.vector_store %arg13[%c0_55, %c0_56], %84 {strides = array<i32>} : memref<32x256xbf16, #tpu.memory_space<vmem>>, vector<32x256xbf16>,
      %c0_57 = arith.constant 0 : index
      %c0_58 = arith.constant 0 : index
      %86 = vector.load %arg8[%c0_57, %c0_58] : memref<32x32xf32, #tpu.memory_space<vmem>>, vector<32x32xf32>
      %cst_59 = arith.constant dense<0.000000e+00> : vector<32x256xf32>
      %87 = tpu.matmul %86, %77, %cst_59 {dimension_numbers = #tpu.dot_dimension_numbers<[1], [0], [0], [1], [0, 0, 1, 1], [], []>} : vector<32x32xf32>, vector<32x256xf32>, vector<32x256xf32> -> vector<32x256xf32>
      %88 = arith.truncf %87 : vector<32x256xf32> to vector<32x256xbf16>
      %c0_60 = arith.constant 0 : index
      %c0_61 = arith.constant 0 : index
      %89 = vector.load %arg14[%c0_60, %c0_61] : memref<32x256xbf16, #tpu.memory_space<vmem>>, vector<32x256xbf16>
      tpu.vector_store %arg14[%c0_60, %c0_61], %88 {strides = array<i32>} : memref<32x256xbf16, #tpu.memory_space<vmem>>, vector<32x256xbf16>,
    } else {
    }
    %c128_i32 = arith.constant 128 : i32
    %3 = arith.muli %arg1, %c128_i32 : i32
    %4 = tpu.assume_multiple %3, 128 : i32
    %c0 = arith.constant 0 : index
    %5 = arith.index_cast %4 : i32 to index
    %6 = vector.load %arg12[%c0, %5] : memref<32x256xbf16, #tpu.memory_space<vmem>>, vector<32x128xbf16>
    %c0_1 = arith.constant 0 : index
    %c0_2 = arith.constant 0 : index
    %7 = vector.load %arg13[%c0_1, %c0_2] : memref<32x256xbf16, #tpu.memory_space<vmem>>, vector<16x256xbf16>
    %c0_3 = arith.constant 0 : index
    %c0_4 = arith.constant 0 : index
    %8 = vector.load %arg14[%c0_3, %c0_4] : memref<32x256xbf16, #tpu.memory_space<vmem>>, vector<16x256xbf16>
    %9 = vector.extract_strided_slice %6 {offsets = [0, 0], sizes = [16, 128], strides = [1, 1]} : vector<32x128xbf16> to vector<16x128xbf16>
    %cst = arith.constant dense<0.000000e+00> : vector<128x256xf32>
    %10 = tpu.matmul %9, %7, %cst {dimension_numbers = #tpu.dot_dimension_numbers<[0], [0], [1], [1], [0, 1, 1, 1], [], []>} : vector<16x128xbf16>, vector<16x256xbf16>, vector<128x256xf32> -> vector<128x256xf32>
    %cst_5 = arith.constant dense<0xFF800000> : vector<128xf32>
    %11 = vector.multi_reduction <maximumf>, %10, %cst_5 [1] : vector<128x256xf32> to vector<128xf32>
    %12 = vector.shape_cast %11 : vector<128xf32> to vector<128x1xf32>
    %13 = vector.broadcast %12 : vector<128x1xf32> to vector<128x256xf32>
    %14 = arith.subf %10, %13 : vector<128x256xf32>
    %15 = math.exp %14 : vector<128x256xf32>
    %cst_6 = arith.constant dense<0.000000e+00> : vector<128xf32>
    %16 = vector.multi_reduction <add>, %15, %cst_6 [1] : vector<128x256xf32> to vector<128xf32>
    %17 = vector.shape_cast %16 : vector<128xf32> to vector<128x1xf32>
    %18 = tpu.reciprocal %17 {approx = true} : vector<128x1xf32> -> vector<128x1xf32>
    %19 = vector.broadcast %18 : vector<128x1xf32> to vector<128x256xf32>
    %20 = arith.mulf %15, %19 : vector<128x256xf32>
    %21 = arith.truncf %20 : vector<128x256xf32> to vector<128x256xbf16>
    %cst_7 = arith.constant dense<0.000000e+00> : vector<16x128xf32>
    %22 = tpu.matmul %8, %21, %cst_7 {dimension_numbers = #tpu.dot_dimension_numbers<[1], [1], [0], [0], [0, 0, 1, 0], [], []>} : vector<16x256xbf16>, vector<128x256xbf16>, vector<16x128xf32> -> vector<16x128xf32>
    %c0_8 = arith.constant 0 : index
    %c0_9 = arith.constant 0 : index
    %23 = vector.load %arg15[%c0_8, %c0_9] : memref<32x128xf32, #tpu.memory_space<vmem>>, vector<16x128xf32>
    tpu.vector_store %arg15[%c0_8, %c0_9], %22 {strides = array<i32>} : memref<32x128xf32, #tpu.memory_space<vmem>>, vector<16x128xf32>,
    %c16 = arith.constant 16 : index
    %c0_10 = arith.constant 0 : index
    %24 = vector.load %arg13[%c16, %c0_10] : memref<32x256xbf16, #tpu.memory_space<vmem>>, vector<16x256xbf16>
    %c16_11 = arith.constant 16 : index
    %c0_12 = arith.constant 0 : index
    %25 = vector.load %arg14[%c16_11, %c0_12] : memref<32x256xbf16, #tpu.memory_space<vmem>>, vector<16x256xbf16>
    %26 = vector.extract_strided_slice %6 {offsets = [16, 0], sizes = [16, 128], strides = [1, 1]} : vector<32x128xbf16> to vector<16x128xbf16>
    %cst_13 = arith.constant dense<0.000000e+00> : vector<128x256xf32>
    %27 = tpu.matmul %26, %24, %cst_13 {dimension_numbers = #tpu.dot_dimension_numbers<[0], [0], [1], [1], [0, 1, 1, 1], [], []>} : vector<16x128xbf16>, vector<16x256xbf16>, vector<128x256xf32> -> vector<128x256xf32>
    %cst_14 = arith.constant dense<0xFF800000> : vector<128xf32>
    %28 = vector.multi_reduction <maximumf>, %27, %cst_14 [1] : vector<128x256xf32> to vector<128xf32>
    %29 = vector.shape_cast %28 : vector<128xf32> to vector<128x1xf32>
    %30 = vector.broadcast %29 : vector<128x1xf32> to vector<128x256xf32>
    %31 = arith.subf %27, %30 : vector<128x256xf32>
    %32 = math.exp %31 : vector<128x256xf32>
    %cst_15 = arith.constant dense<0.000000e+00> : vector<128xf32>
    %33 = vector.multi_reduction <add>, %32, %cst_15 [1] : vector<128x256xf32> to vector<128xf32>
    %34 = vector.shape_cast %33 : vector<128xf32> to vector<128x1xf32>
    %35 = tpu.reciprocal %34 {approx = true} : vector<128x1xf32> -> vector<128x1xf32>
    %36 = vector.broadcast %35 : vector<128x1xf32> to vector<128x256xf32>
    %37 = arith.mulf %32, %36 : vector<128x256xf32>
    %38 = arith.truncf %37 : vector<128x256xf32> to vector<128x256xbf16>
    %cst_16 = arith.constant dense<0.000000e+00> : vector<16x128xf32>
    %39 = tpu.matmul %25, %38, %cst_16 {dimension_numbers = #tpu.dot_dimension_numbers<[1], [1], [0], [0], [0, 0, 1, 0], [], []>} : vector<16x256xbf16>, vector<128x256xbf16>, vector<16x128xf32> -> vector<16x128xf32>
    %c16_17 = arith.constant 16 : index
    %c0_18 = arith.constant 0 : index
    %40 = vector.load %arg15[%c16_17, %c0_18] : memref<32x128xf32, #tpu.memory_space<vmem>>, vector<16x128xf32>
    tpu.vector_store %arg15[%c16_17, %c0_18], %39 {strides = array<i32>} : memref<32x128xf32, #tpu.memory_space<vmem>>, vector<16x128xf32>,
    %c0_19 = arith.constant 0 : index
    %c0_20 = arith.constant 0 : index
    %41 = vector.load %arg9[%c0_19, %c0_20] : memref<32x32xf32, #tpu.memory_space<vmem>>, vector<32x32xf32>
    %c0_21 = arith.constant 0 : index
    %c0_22 = arith.constant 0 : index
    %42 = vector.load %arg15[%c0_21, %c0_22] : memref<32x128xf32, #tpu.memory_space<vmem>>, vector<32x128xf32>
    %cst_23 = arith.constant dense<0.000000e+00> : vector<32x128xf32>
    %43 = tpu.matmul %41, %42, %cst_23 {dimension_numbers = #tpu.dot_dimension_numbers<[1], [0], [0], [1], [0, 0, 1, 1], [], []>} : vector<32x32xf32>, vector<32x128xf32>, vector<32x128xf32> -> vector<32x128xf32>
    %c0_24 = arith.constant 0 : index
    %c0_25 = arith.constant 0 : index
    %44 = vector.load %arg10[%c0_24, %c0_25] : memref<32x1xf32, #tpu.memory_space<vmem>>, vector<32x1xf32>
    %45 = vector.broadcast %44 : vector<32x1xf32> to vector<32x128xf32>
    %46 = arith.addf %43, %45 : vector<32x128xf32>
    %c0_26 = arith.constant 0 : index
    %c0_27 = arith.constant 0 : index
    %47 = arith.index_cast %4 : i32 to index
    %48 = vector.load %arg2[%c0_26, %c0_27, %47] : memref<1x32x256xf32, #tpu.memory_space<vmem>>, vector<1x32x128xf32>
    %49 = vector.shape_cast %48 : vector<1x32x128xf32> to vector<32x128xf32>
    %50 = arith.addf %46, %49 : vector<32x128xf32>
    %c0_28 = arith.constant 0 : index
    %c0_29 = arith.constant 0 : index
    %c0_30 = arith.constant 0 : index
    %51 = vector.load %arg11[%c0_28, %c0_29, %c0_30] : memref<1x32x128xf32, #tpu.memory_space<vmem>>, vector<1x32x128xf32>
    %52 = vector.shape_cast %51 : vector<1x32x128xf32> to vector<32x128xf32>
    %53 = vector.shape_cast %50 : vector<32x128xf32> to vector<1x32x128xf32>
    tpu.vector_store %arg11[%c0_28, %c0_29, %c0_30], %53 {strides = array<i32>} : memref<1x32x128xf32, #tpu.memory_space<vmem>>, vector<1x32x128xf32>,
    return
  }
  func.func @transform_0(%arg0: i32, %arg1: i32) -> (i32, i32, i32) {
    %c0_i32 = arith.constant 0 : i32
    %c0_i32_0 = arith.constant 0 : i32
    %c0_i32_1 = arith.constant 0 : i32
    return %arg0, %c0_i32, %c0_i32_0 : i32, i32, i32
  }
  func.func @transform_1(%arg0: i32, %arg1: i32) -> (i32, i32) {
    %c0_i32 = arith.constant 0 : i32
    %c0_i32_0 = arith.constant 0 : i32
    %c0_i32_1 = arith.constant 0 : i32
    return %c0_i32, %c0_i32_0 : i32, i32
  }
  func.func @transform_2(%arg0: i32, %arg1: i32) -> (i32, i32) {
    %c0_i32 = arith.constant 0 : i32
    %c0_i32_0 = arith.constant 0 : i32
    %c0_i32_1 = arith.constant 0 : i32
    return %c0_i32, %c0_i32_0 : i32, i32
  }
  func.func @transform_3(%arg0: i32, %arg1: i32) -> (i32, i32) {
    %c0_i32 = arith.constant 0 : i32
    %c0_i32_0 = arith.constant 0 : i32
    %c0_i32_1 = arith.constant 0 : i32
    return %c0_i32, %c0_i32_0 : i32, i32
  }
  func.func @transform_4(%arg0: i32, %arg1: i32) -> (i32, i32) {
    %c0_i32 = arith.constant 0 : i32
    %c0_i32_0 = arith.constant 0 : i32
    %c0_i32_1 = arith.constant 0 : i32
    return %c0_i32, %c0_i32_0 : i32, i32
  }
  func.func @transform_5(%arg0: i32, %arg1: i32) -> (i32, i32) {
    %c0_i32 = arith.constant 0 : i32
    %c0_i32_0 = arith.constant 0 : i32
    %c0_i32_1 = arith.constant 0 : i32
    return %c0_i32, %c0_i32_0 : i32, i32
  }
  func.func @transform_6(%arg0: i32, %arg1: i32) -> (i32, i32) {
    %c0_i32 = arith.constant 0 : i32
    %c0_i32_0 = arith.constant 0 : i32
    %c0_i32_1 = arith.constant 0 : i32
    return %c0_i32, %c0_i32_0 : i32, i32
  }
  func.func @transform_7(%arg0: i32, %arg1: i32) -> (i32, i32) {
    %c0_i32 = arith.constant 0 : i32
    %c0_i32_0 = arith.constant 0 : i32
    %c0_i32_1 = arith.constant 0 : i32
    return %c0_i32, %c0_i32_0 : i32, i32
  }
  func.func @transform_8(%arg0: i32, %arg1: i32) -> (i32, i32) {
    %c0_i32 = arith.constant 0 : i32
    %c0_i32_0 = arith.constant 0 : i32
    %c0_i32_1 = arith.constant 0 : i32
    return %c0_i32, %c0_i32_0 : i32, i32
  }
  func.func @transform_9(%arg0: i32, %arg1: i32) -> (i32, i32, i32) {
    %c0_i32 = arith.constant 0 : i32
    %c0_i32_0 = arith.constant 0 : i32
    return %arg0, %c0_i32, %arg1 : i32, i32, i32
  }
}

</mosaic_0001>

<llo_original>
// kernel: tpu_custom_call.1
$region0: #{tpu_custom_call.1}
  #allocation0 [shape = 'u32[]', space=smem, size = 0x4, offset = 0x4, fixed_abs, tag = 'smem constant byte address 0x4 - core index']
  #allocation1 [shape = 'u32[144,128]{1,0:T(1,128)}', space=vmem, size = 0x12000, scoped, tag = 'internal scratch']
  #allocation2 [shape = 'bf16[32,256]{1,0:T(8,128)(2,1)}', space=vmem, size = 0x4000, scoped, tag = 'scratch operand']
  #allocation3 [shape = 'bf16[32,256]{1,0:T(8,128)(2,1)}', space=vmem, size = 0x4000, scoped, tag = 'scratch operand']
  #allocation4 [shape = 'bf16[32,256]{1,0:T(8,128)(2,1)}', space=vmem, size = 0x4000, scoped, tag = 'scratch operand']
  #allocation5 [shape = 'f32[32,128]{1,0:T(8,128)}', space=vmem, size = 0x4000, scoped, tag = 'scratch operand']
  %s0 = inlined_call_operand.hbm [shape: f32[2,32,256], index: 0, kind: input, shape index: {}]
  %s1 = inlined_call_operand.vmem [shape: f32[32,32], index: 1, kind: input, shape index: {}]
  %s2 = inlined_call_operand.vmem [shape: f32[32,1], index: 2, kind: input, shape index: {}]
  %s3 = inlined_call_operand.vmem [shape: f32[32,1], index: 3, kind: input, shape index: {}]
  %s4 = inlined_call_operand.vmem [shape: f32[32,32], index: 4, kind: input, shape index: {}]
  %s5 = inlined_call_operand.vmem [shape: f32[32,32], index: 5, kind: input, shape index: {}]
  %s6 = inlined_call_operand.hbm [shape: f32[32,32], index: 6, kind: input, shape index: {}]
  %s7 = inlined_call_operand.hbm [shape: f32[32,32], index: 7, kind: input, shape index: {}]
  %s8 = inlined_call_operand.vmem [shape: f32[32,1], index: 8, kind: input, shape index: {}]
  %s9 = inlined_call_operand.hbm [shape: f32[2,32,256], index: 9, kind: output, shape index: {}]
  %s10 = sld [smem:[#allocation0]]
  $region85: #{tpu_custom_call.1} parent=0
    _
  %s12 = ssub.s32 1, %s10
  %s13 = scalar_select 0, %s12, %s10
  $region1: #{tpu_custom_call.1} parent=0
    #allocation6 [shape = 'u8[65536]{0}', space=vmem, size = 0x10000, scoped, tag = 'input window, operand 0']
    #allocation7 [shape = 's32[2]{0}', space=sflag, size = 0x8, scoped, tag = 'scoped memory for tpu_custom_call.1']
    #allocation8 [shape = 's32[2]{0}', space=sflag, size = 0x8, scoped, tag = 'scoped memory for tpu_custom_call.1']
    #allocation9 [shape = 'u8[16384]{0}', space=vmem, size = 0x4000, scoped, tag = 'input window, operand 6, single buffered']
    #allocation10 [shape = 's32[1]{0}', space=sflag, size = 0x4, scoped, tag = 'scoped memory for tpu_custom_call.1']
    #allocation11 [shape = 'u8[16384]{0}', space=vmem, size = 0x4000, scoped, tag = 'input window, operand 7, single buffered']
    #allocation12 [shape = 'u8[32768]{0}', space=vmem, size = 0x8000, scoped, tag = 'output window, operand 0']
    %14 = vsyncpa [#allocation7], 0
    %s15 = scalar_lea.sflag [#allocation7], 1
    %16 = vsyncpa %s15, 0
    %17 = vsyncpa [#allocation10], 0
    %18 = vsyncpa [#allocation8], 0
    %s19 = scalar_lea.sflag [#allocation8], 1
    %20 = vsyncpa %s19, 0
    loop: start=0, step=1, limit=6
    $region2: #{tpu_custom_call.1} parent=1 // loop_pre_header
      _
    $region3: #{tpu_custom_call.1} parent=1 // loop_header
      %s22 = sphi 0, %s26
      %p23 = scmp.ge.s32.totalorder %s22, 6
      %s29 = sphi 0, %s41
      %s30 = sphi 0, %s37
      %s31 = sphi 0, %s29
      %s32 = sphi 0, %s30
      %s33 = sphi 0, %s31
      %s34 = sphi 0, %s32
      %s44 = sphi 0, %s46
      %s47 = sphi 0, %s44
      %s48 = sphi 0, %s47
      %s64 = sphi 0, %s48
      %s68 = sphi 0, %s68
      %s70 = sphi 0, %s68
      %s71 = sphi 0, %s70
      %s85 = sphi 0, %s71
      %s89 = sphi 0, %s89
      %s91 = sphi 0, %s89
      %s92 = sphi 0, %s91
      %s106 = sphi 0, %s92
      %s110 = sphi 0, %s110
      %s112 = sphi 0, %s110
      %s113 = sphi 0, %s112
      %s127 = sphi 0, %s113
      %s131 = sphi 0, %s131
      %s133 = sphi 0, %s131
      %s134 = sphi 0, %s133
      %s148 = sphi 0, %s134
      %s152 = sphi 0, %s152
      %s154 = sphi 0, %s152
      %s155 = sphi 0, %s154
      %s169 = sphi 0, %s155
      %s173 = sphi 0, %s173
      %s175 = sphi 0, %s173
      %s176 = sphi 0, %s175
      %s190 = sphi 0, %s176
      %s194 = sphi 0, %s194
      %s196 = sphi 0, %s194
      %s197 = sphi 0, %s196
      %s211 = sphi 0, %s197
      %s215 = sphi 0, %s215
      %s217 = sphi 0, %s215
      %s218 = sphi 0, %s217
      %s232 = sphi 0, %s218
      %s240 = sphi 0, %s242
      %s243 = sphi 0, %s240
      %s244 = sphi 0, %s243
      %s260 = sphi 0, %s244
    $region4: #{tpu_custom_call.1} parent=1 // loop_header_branch
      %25 = sbr.rel (%p23) target = $region8
    $region5: #{tpu_custom_call.1} parent=1 // loop_body
      %s27 = ssub.s32 %s22, 1
      %s28 = ssub.s32 %s22, 2
      %s35 = sadd.s32 1, %s30
      %p36 = scmp.ge.s32.totalorder %s35, 2
      %s37 = scalar_select %p36, 0, %s35
      %s38 = sadd.s32 1, %s29
      %s39 = scalar_select %p36, %s38, %s29
      %p40 = scmp.ge.s32.totalorder %s39, 2
      %s41 = scalar_select %p40, 0, %s39
      %s42 = ssub.s32 %s29, %s41
      %p43 = scmp.eq.s32.totalorder %s42, 0
      %s45 = sadd.s32 %s44, 1
      %s46 = scalar_select %p43, %s44, %s45
      %p49 = pneg %p43
      %p50 = scmp.eq.s32.totalorder %s22, 3
      %p51 = por %p49, %p50
      %p52 = scmp.ne.s32.totalorder %s44, %s47
      %p53 = scmp.eq.s32.totalorder %s22, 0
      %p54 = por %p52, %p53
      %p55 = scmp.ne.s32.totalorder %s44, %s47
      %p56 = scmp.eq.s32.totalorder %s27, 3
      %p57 = por %p55, %p56
      %p58 = scmp.ne.s32.totalorder %s47, %s48
      %p59 = scmp.eq.s32.totalorder %s27, 0
      %p60 = por %p58, %p59
      %p61 = scmp.ne.s32.totalorder %s47, %s48
      %p62 = scmp.eq.s32.totalorder %s28, 3
      %p63 = por %p61, %p62
      %p65 = scmp.ne.s32.totalorder %s48, %s64
      %p66 = scmp.eq.s32.totalorder %s28, 0
      %p67 = por %p65, %p66
      %s69 = sadd.s32 %s68, 1
      %p72 = scmp.eq.s32.totalorder %s22, 3
      %p73 = scmp.ne.s32.totalorder %s68, %s70
      %p74 = scmp.eq.s32.totalorder %s22, 0
      %p75 = por %p73, %p74
      %p76 = scmp.ne.s32.totalorder %s68, %s70
      %p77 = scmp.eq.s32.totalorder %s27, 3
      %p78 = por %p76, %p77
      %p79 = scmp.ne.s32.totalorder %s70, %s71
      %p80 = scmp.eq.s32.totalorder %s27, 0
      %p81 = por %p79, %p80
      %p82 = scmp.ne.s32.totalorder %s70, %s71
      %p83 = scmp.eq.s32.totalorder %s28, 3
      %p84 = por %p82, %p83
      %p86 = scmp.ne.s32.totalorder %s71, %s85
      %p87 = scmp.eq.s32.totalorder %s28, 0
      %p88 = por %p86, %p87
      %s90 = sadd.s32 %s89, 1
      %p93 = scmp.eq.s32.totalorder %s22, 3
      %p94 = scmp.ne.s32.totalorder %s89, %s91
      %p95 = scmp.eq.s32.totalorder %s22, 0
      %p96 = por %p94, %p95
      %p97 = scmp.ne.s32.totalorder %s89, %s91
      %p98 = scmp.eq.s32.totalorder %s27, 3
      %p99 = por %p97, %p98
      %p100 = scmp.ne.s32.totalorder %s91, %s92
      %p101 = scmp.eq.s32.totalorder %s27, 0
      %p102 = por %p100, %p101
      %p103 = scmp.ne.s32.totalorder %s91, %s92
      %p104 = scmp.eq.s32.totalorder %s28, 3
      %p105 = por %p103, %p104
      %p107 = scmp.ne.s32.totalorder %s92, %s106
      %p108 = scmp.eq.s32.totalorder %s28, 0
      %p109 = por %p107, %p108
      %s111 = sadd.s32 %s110, 1
      %p114 = scmp.eq.s32.totalorder %s22, 3
      %p115 = scmp.ne.s32.totalorder %s110, %s112
      %p116 = scmp.eq.s32.totalorder %s22, 0
      %p117 = por %p115, %p116
      %p118 = scmp.ne.s32.totalorder %s110, %s112
      %p119 = scmp.eq.s32.totalorder %s27, 3
      %p120 = por %p118, %p119
      %p121 = scmp.ne.s32.totalorder %s112, %s113
      %p122 = scmp.eq.s32.totalorder %s27, 0
      %p123 = por %p121, %p122
      %p124 = scmp.ne.s32.totalorder %s112, %s113
      %p125 = scmp.eq.s32.totalorder %s28, 3
      %p126 = por %p124, %p125
      %p128 = scmp.ne.s32.totalorder %s113, %s127
      %p129 = scmp.eq.s32.totalorder %s28, 0
      %p130 = por %p128, %p129
      %s132 = sadd.s32 %s131, 1
      %p135 = scmp.eq.s32.totalorder %s22, 3
      %p136 = scmp.ne.s32.totalorder %s131, %s133
      %p137 = scmp.eq.s32.totalorder %s22, 0
      %p138 = por %p136, %p137
      %p139 = scmp.ne.s32.totalorder %s131, %s133
      %p140 = scmp.eq.s32.totalorder %s27, 3
      %p141 = por %p139, %p140
      %p142 = scmp.ne.s32.totalorder %s133, %s134
      %p143 = scmp.eq.s32.totalorder %s27, 0
      %p144 = por %p142, %p143
      %p145 = scmp.ne.s32.totalorder %s133, %s134
      %p146 = scmp.eq.s32.totalorder %s28, 3
      %p147 = por %p145, %p146
      %p149 = scmp.ne.s32.totalorder %s134, %s148
      %p150 = scmp.eq.s32.totalorder %s28, 0
      %p151 = por %p149, %p150
      %s153 = sadd.s32 %s152, 1
      %p156 = scmp.eq.s32.totalorder %s22, 3
      %p157 = scmp.ne.s32.totalorder %s152, %s154
      %p158 = scmp.eq.s32.totalorder %s22, 0
      %p159 = por %p157, %p158
      %p160 = scmp.ne.s32.totalorder %s152, %s154
      %p161 = scmp.eq.s32.totalorder %s27, 3
      %p162 = por %p160, %p161
      %p163 = scmp.ne.s32.totalorder %s154, %s155
      %p164 = scmp.eq.s32.totalorder %s27, 0
      %p165 = por %p163, %p164
      %p166 = scmp.ne.s32.totalorder %s154, %s155
      %p167 = scmp.eq.s32.totalorder %s28, 3
      %p168 = por %p166, %p167
      %p170 = scmp.ne.s32.totalorder %s155, %s169
      %p171 = scmp.eq.s32.totalorder %s28, 0
      %p172 = por %p170, %p171
      %s174 = sadd.s32 %s173, 1
      %p177 = scmp.eq.s32.totalorder %s22, 3
      %p178 = scmp.ne.s32.totalorder %s173, %s175
      %p179 = scmp.eq.s32.totalorder %s22, 0
      %p180 = por %p178, %p179
      %p181 = scmp.ne.s32.totalorder %s173, %s175
      %p182 = scmp.eq.s32.totalorder %s27, 3
      %p183 = por %p181, %p182
      %p184 = scmp.ne.s32.totalorder %s175, %s176
      %p185 = scmp.eq.s32.totalorder %s27, 0
      %p186 = por %p184, %p185
      %p187 = scmp.ne.s32.totalorder %s175, %s176
      %p188 = scmp.eq.s32.totalorder %s28, 3
      %p189 = por %p187, %p188
      %p191 = scmp.ne.s32.totalorder %s176, %s190
      %p192 = scmp.eq.s32.totalorder %s28, 0
      %p193 = por %p191, %p192
      %s195 = sadd.s32 %s194, 1
      %p198 = scmp.eq.s32.totalorder %s22, 3
      %p199 = scmp.ne.s32.totalorder %s194, %s196
      %p200 = scmp.eq.s32.totalorder %s22, 0
      %p201 = por %p199, %p200
      %p202 = scmp.ne.s32.totalorder %s194, %s196
      %p203 = scmp.eq.s32.totalorder %s27, 3
      %p204 = por %p202, %p203
      %p205 = scmp.ne.s32.totalorder %s196, %s197
      %p206 = scmp.eq.s32.totalorder %s27, 0
      %p207 = por %p205, %p206
      %p208 = scmp.ne.s32.totalorder %s196, %s197
      %p209 = scmp.eq.s32.totalorder %s28, 3
      %p210 = por %p208, %p209
      %p212 = scmp.ne.s32.totalorder %s197, %s211
      %p213 = scmp.eq.s32.totalorder %s28, 0
      %p214 = por %p212, %p213
      %s216 = sadd.s32 %s215, 1
      %p219 = scmp.eq.s32.totalorder %s22, 3
      %p220 = scmp.ne.s32.totalorder %s215, %s217
      %p221 = scmp.eq.s32.totalorder %s22, 0
      %p222 = por %p220, %p221
      %p223 = scmp.ne.s32.totalorder %s215, %s217
      %p224 = scmp.eq.s32.totalorder %s27, 3
      %p225 = por %p223, %p224
      %p226 = scmp.ne.s32.totalorder %s217, %s218
      %p227 = scmp.eq.s32.totalorder %s27, 0
      %p228 = por %p226, %p227
      %p229 = scmp.ne.s32.totalorder %s217, %s218
      %p230 = scmp.eq.s32.totalorder %s28, 3
      %p231 = por %p229, %p230
      %p233 = scmp.ne.s32.totalorder %s218, %s232
      %p234 = scmp.eq.s32.totalorder %s28, 0
      %p235 = por %p233, %p234
      %s236 = ssub.s32 %s29, %s41
      %s237 = ssub.s32 %s30, %s37
      %s238 = sor.u32 %s236, %s237
      %p239 = scmp.eq.s32.totalorder %s238, 0
      %s241 = sadd.s32 %s240, 1
      %s242 = scalar_select %p239, %s240, %s241
      %p245 = pneg %p239
      %p246 = scmp.eq.s32.totalorder %s22, 3
      %p247 = por %p245, %p246
      %p248 = scmp.ne.s32.totalorder %s240, %s243
      %p249 = scmp.eq.s32.totalorder %s22, 0
      %p250 = por %p248, %p249
      %p251 = scmp.ne.s32.totalorder %s240, %s243
      %p252 = scmp.eq.s32.totalorder %s27, 3
      %p253 = por %p251, %p252
      %p254 = scmp.ne.s32.totalorder %s243, %s244
      %p255 = scmp.eq.s32.totalorder %s27, 0
      %p256 = por %p254, %p255
      %p257 = scmp.ne.s32.totalorder %s243, %s244
      %p258 = scmp.eq.s32.totalorder %s28, 3
      %p259 = por %p257, %p258
      %p261 = scmp.ne.s32.totalorder %s244, %s260
      %p262 = scmp.eq.s32.totalorder %s28, 0
      %p263 = por %p261, %p262
      %p264 = scmp.le.s32.totalorder 1, %s22
      %p265 = scmp.lt.s32.totalorder %s22, 5
      %p266 = pnand %p264, %p265
      %p267 = pneg %p266
      // Predicated region
      $region9: #{tpu_custom_call.1} parent=5 // pred_check
        _
      $region10: #{tpu_custom_call.1} parent=5 // pred_check_branch
        %269 = sbr.rel (%p266) target = $region12
      $region11: #{tpu_custom_call.1} parent=5 // pred_region
        %s270 = ssub.s32 %s22, 1
        // Predicated region
        $region13: #{tpu_custom_call.1} parent=11 // pred_check
          %p271 = pneg %p81
        $region14: #{tpu_custom_call.1} parent=11 // pred_check_branch
          %273 = sbr.rel (%p271) target = $region16
        $region15: #{tpu_custom_call.1} parent=11 // pred_region
          _
        $region16: #{tpu_custom_call.1} parent=11 // pred_fallthru
          _
        // Predicated region
        $region17: #{tpu_custom_call.1} parent=11 // pred_check
          %p274 = pneg %p102
        $region18: #{tpu_custom_call.1} parent=11 // pred_check_branch
          %276 = sbr.rel (%p274) target = $region20
        $region19: #{tpu_custom_call.1} parent=11 // pred_region
          _
        $region20: #{tpu_custom_call.1} parent=11 // pred_fallthru
          _
        // Predicated region
        $region21: #{tpu_custom_call.1} parent=11 // pred_check
          %p277 = pneg %p123
        $region22: #{tpu_custom_call.1} parent=11 // pred_check_branch
          %279 = sbr.rel (%p277) target = $region24
        $region23: #{tpu_custom_call.1} parent=11 // pred_region
          _
        $region24: #{tpu_custom_call.1} parent=11 // pred_fallthru
          _
        // Predicated region
        $region25: #{tpu_custom_call.1} parent=11 // pred_check
          %p280 = pneg %p144
        $region26: #{tpu_custom_call.1} parent=11 // pred_check_branch
          %282 = sbr.rel (%p280) target = $region28
        $region27: #{tpu_custom_call.1} parent=11 // pred_region
          _
        $region28: #{tpu_custom_call.1} parent=11 // pred_fallthru
          _
        // Predicated region
        $region29: #{tpu_custom_call.1} parent=11 // pred_check
          %p283 = pneg %p165
        $region30: #{tpu_custom_call.1} parent=11 // pred_check_branch
          %285 = sbr.rel (%p283) target = $region32
        $region31: #{tpu_custom_call.1} parent=11 // pred_region
          _
        $region32: #{tpu_custom_call.1} parent=11 // pred_fallthru
          _
        // Predicated region
        $region33: #{tpu_custom_call.1} parent=11 // pred_check
          %p286 = pneg %p186
        $region34: #{tpu_custom_call.1} parent=11 // pred_check_branch
          %288 = sbr.rel (%p286) target = $region36
        $region35: #{tpu_custom_call.1} parent=11 // pred_region
          %s290 = ssub.s32 512, 512
          %291 = vsyncadd [#allocation10], %s290
          %s292 = sshll.u32 [#allocation9], 4
          %s293 = int_to_ptr.vmem [resolvable:$true] %s292
          %298 = dma.hbm_to_vmem [thread:$0]  %s6, 512, %s293, [#allocation10], 128, 128, 8
        $region36: #{tpu_custom_call.1} parent=11 // pred_fallthru
          _
        // Predicated region
        $region37: #{tpu_custom_call.1} parent=11 // pred_check
          %p299 = pneg %p207
        $region38: #{tpu_custom_call.1} parent=11 // pred_check_branch
          %301 = sbr.rel (%p299) target = $region40
        $region39: #{tpu_custom_call.1} parent=11 // pred_region
          %s303 = ssub.s32 512, 512
          %304 = vsyncadd [#allocation10], %s303
          %s305 = sshll.u32 [#allocation11], 4
          %s306 = int_to_ptr.vmem [resolvable:$true] %s305
          %311 = dma.hbm_to_vmem [thread:$0]  %s7, 512, %s306, [#allocation10], 128, 128, 8
        $region40: #{tpu_custom_call.1} parent=11 // pred_fallthru
          _
        // Predicated region
        $region41: #{tpu_custom_call.1} parent=11 // pred_check
          %p312 = pneg %p228
        $region42: #{tpu_custom_call.1} parent=11 // pred_check_branch
          %314 = sbr.rel (%p312) target = $region44
        $region43: #{tpu_custom_call.1} parent=11 // pred_region
          _
        $region44: #{tpu_custom_call.1} parent=11 // pred_fallthru
          _
      $region12: #{tpu_custom_call.1} parent=5 // pred_fallthru
        _
      %p315 = scmp.lt.s32.totalorder %s22, 4
      // Predicated region
      $region45: #{tpu_custom_call.1} parent=5 // pred_check
        %p316 = pneg %p315
      $region46: #{tpu_custom_call.1} parent=5 // pred_check_branch
        %318 = sbr.rel (%p316) target = $region48
      $region47: #{tpu_custom_call.1} parent=5 // pred_region
        // Predicated region
        $region49: #{tpu_custom_call.1} parent=47 // pred_check
          %p319 = pneg %p54
        $region50: #{tpu_custom_call.1} parent=47 // pred_check_branch
          %321 = sbr.rel (%p319) target = $region52
        $region51: #{tpu_custom_call.1} parent=47 // pred_region
          %s322 = sand.u32 %s44, 1
          %s323 = scalar_lea.sflag [#allocation7], %s322
          %s324 = sand.u32 %s44, 1
          %s325 = smul.addr %s324, 64
          %s326 = scalar_lea.vmem [#allocation6], %s325
          %s328 = ssub.s32 1024, 1024
          %329 = vsyncadd %s323, %s328
          %s330 = smul.addr %s29, 8
          %s331 = smul.addr %s330, 128
          %s332 = scalar_lea.hbm %s0, %s331
          %s333 = sshll.u32 %s326, 4
          %s334 = int_to_ptr.vmem [resolvable:$true] %s333
          %339 = dma.hbm_to_vmem [thread:$0]  %s332, 1024, %s334, %s323, 256, 256, 16
        $region52: #{tpu_custom_call.1} parent=47 // pred_fallthru
          _
      $region48: #{tpu_custom_call.1} parent=5 // pred_fallthru
        _
      %p340 = scmp.le.s32.totalorder 1, %s22
      %p341 = scmp.lt.s32.totalorder %s22, 5
      %p342 = pnand %p340, %p341
      %p343 = pneg %p342
      // Predicated region
      $region53: #{tpu_custom_call.1} parent=5 // pred_check
        _
      $region54: #{tpu_custom_call.1} parent=5 // pred_check_branch
        %345 = sbr.rel (%p342) target = $region56
      $region55: #{tpu_custom_call.1} parent=5 // pred_region
        %s346 = ssub.s32 %s22, 1
        %s347 = sand.u32 %s47, 1
        %s348 = scalar_lea.sflag [#allocation7], %s347
        %s349 = sand.u32 %s47, 1
        %s350 = smul.addr %s349, 64
        %s351 = scalar_lea.vmem [#allocation6], %s350
        // Predicated region
        $region57: #{tpu_custom_call.1} parent=55 // pred_check
          %p352 = pneg %p60
        $region58: #{tpu_custom_call.1} parent=55 // pred_check_branch
          %354 = sbr.rel (%p352) target = $region60
        $region59: #{tpu_custom_call.1} parent=55 // pred_region
          %355 = dma.done %s348, 1024
        $region60: #{tpu_custom_call.1} parent=55 // pred_fallthru
          _
        // Predicated region
        $region61: #{tpu_custom_call.1} parent=55 // pred_check
          %p356 = pneg %p186
        $region62: #{tpu_custom_call.1} parent=55 // pred_check_branch
          %358 = sbr.rel (%p356) target = $region64
        $region63: #{tpu_custom_call.1} parent=55 // pred_region
          %359 = dma.done [#allocation10], 512
        $region64: #{tpu_custom_call.1} parent=55 // pred_fallthru
          _
        // Predicated region
        $region65: #{tpu_custom_call.1} parent=55 // pred_check
          %p360 = pneg %p207
        $region66: #{tpu_custom_call.1} parent=55 // pred_check_branch
          %362 = sbr.rel (%p360) target = $region68
        $region67: #{tpu_custom_call.1} parent=55 // pred_region
          %363 = dma.done [#allocation10], 512
        $region68: #{tpu_custom_call.1} parent=55 // pred_fallthru
          _
        %s364 = sand.u32 %s47, 1
        %s365 = scalar_lea.sflag [#allocation7], %s364
        %s366 = sand.u32 %s47, 1
        %s367 = smul.addr %s366, 64
        %s368 = scalar_lea.vmem [#allocation6], %s367
        %p369 = pneg %p60
        %p370 = pneg %p57
        %p371 = pneg %p81
        %p372 = pneg %p78
        %p373 = pneg %p102
        %p374 = pneg %p99
        %p375 = pneg %p123
        %p376 = pneg %p120
        %p377 = pneg %p144
        %p378 = pneg %p141
        %p379 = pneg %p165
        %p380 = pneg %p162
        %p381 = pneg %p186
        %p382 = pneg %p183
        %p383 = pneg %p207
        %p384 = pneg %p204
        %p385 = pneg %p228
        %p386 = pneg %p225
        %p387 = pneg %p256
        %p388 = pneg %p253
        %s389 = sand.u32 %s243, 1
        %s390 = scalar_lea.sflag [#allocation8], %s389
        %s391 = sand.u32 %s243, 1
        %s392 = smul.addr %s391, 32
        %s393 = scalar_lea.vmem [#allocation12], %s392
        %p395 = scmp.eq.s32.totalorder %s32, 0
        // Predicated region
        $region69: #{tpu_custom_call.1} parent=55 // pred_check
          %p396 = pneg %p395
        $region70: #{tpu_custom_call.1} parent=55 // pred_check_branch
          %398 = sbr.rel (%p396) target = $region72
        $region71: #{tpu_custom_call.1} parent=55 // pred_region
          %v399 = vld [vmem:[%s351] sm:$0xff]
          %v400 = vld [vmem:[%s351 + $0x8] sm:$0xff]
          %v401 = vld [vmem:[%s351 + $0x10] sm:$0xff]
          %v402 = vld [vmem:[%s351 + $0x18] sm:$0xff]
          %v403 = vld [vmem:[%s351 + $0x20] sm:$0xff]
          %v404 = vld [vmem:[%s351 + $0x28] sm:$0xff]
          %v405 = vld [vmem:[%s351 + $0x30] sm:$0xff]
          %v406 = vld [vmem:[%s351 + $0x38] sm:$0xff]
          %v407 = vadd.f32 %v399, %v400
          %408 = vadd.xlane.f32.xlu0 %v407
          %v409 = vpop.xlane.xlu0 %408
          %v410 = vadd.f32 %v401, %v402
          %411 = vadd.xlane.f32.xlu0 %v410
          %v412 = vpop.xlane.xlu0 %411
          %v413 = vadd.f32 %v403, %v404
          %414 = vadd.xlane.f32.xlu0 %v413
          %v415 = vpop.xlane.xlu0 %414
          %v416 = vadd.f32 %v405, %v406
          %417 = vadd.xlane.f32.xlu0 %v416
          %v418 = vpop.xlane.xlu0 %417
          %v419 = vld [vmem:[%s1] sm:$0xff]
          %v420 = vld [vmem:[%s1 + $0x8] sm:$0xff]
          %v421 = vld [vmem:[%s1 + $0x10] sm:$0xff]
          %v422 = vld [vmem:[%s1 + $0x18] sm:$0xff]
          %vm423 = vcmask 261120
          %v425 = vsel %vm423, %v419, 0
          %v428 = vsel %vm423, %v420, 0
          %v431 = vsel %vm423, %v421, 0
          %v434 = vsel %vm423, %v422, 0
          %436 = vmatprep.subr.mxu0 0.0
          %437 = vmatpush1.msra.mxu0 0.0
          %438 = vmatprep.subr.mxu0 0.0
          %439 = vmatpush1.msra.mxu0 0.0
          %440 = vmatprep.subr.mxu0 0.0
          %441 = vmatpush1.msra.mxu0 0.0
          %442 = vmatprep.subr.mxu0 0.0
          %443 = vmatpush1.msra.mxu0 0.0
          %444 = vmatprep.subr.mxu0 0.0
          %445 = vmatpush1.msra.mxu0 0.0
          %446 = vmatprep.subr.mxu0 0.0
          %447 = vmatpush1.msra.mxu0 0.0
          %448 = vmatprep.subr.mxu0 0.0
          %449 = vmatpush1.msra.mxu0 0.0
          %450 = vmatprep.subr.mxu0 0.0
          %451 = vmatpush1.msra.mxu0 0.0
          %452 = vmatprep.subr.mxu0 0.0
          %453 = vmatpush1.msra.mxu0 0.0
          %454 = vmatprep.subr.mxu0 0.0
          %455 = vmatpush1.msra.mxu0 0.0
          %456 = vmatprep.subr.mxu0 0.0
          %457 = vmatpush1.msra.mxu0 0.0
          %458 = vmatprep.subr.mxu0 0.0
          %459 = vmatpush1.msra.mxu0 0.0
          %460 = vmatprep.subr.mxu0 0.0
          %461 = vmatpush1.msra.mxu0 %v418
          %462 = vmatprep.subr.mxu0 0.0
          %463 = vmatpush1.msra.mxu0 %v415
          %464 = vmatprep.subr.mxu0 0.0
          %465 = vmatpush1.msra.mxu0 %v412
          %466 = vmatprep.subr.mxu0 0.0
          %467 = vmatpush1.msra.mxu0 %v409
          %468 = vmatprep.subr.mxu0 0.0
          %469 = vmatpush2.msra.mxu0 0.0
          %470 = vmatprep.subr.mxu0 0.0
          %471 = vmatpush2.msra.mxu0 0.0
          %472 = vmatprep.subr.mxu0 0.0
          %473 = vmatpush2.msra.mxu0 0.0
          %474 = vmatprep.subr.mxu0 0.0
          %475 = vmatpush2.msra.mxu0 0.0
          %476 = vmatprep.subr.mxu0 0.0
          %477 = vmatpush2.msra.mxu0 0.0
          %478 = vmatprep.subr.mxu0 0.0
          %479 = vmatpush2.msra.mxu0 0.0
          %480 = vmatprep.subr.mxu0 0.0
          %481 = vmatpush2.msra.mxu0 0.0
          %482 = vmatprep.subr.mxu0 0.0
          %483 = vmatpush2.msra.mxu0 0.0
          %484 = vmatprep.subr.mxu0 0.0
          %485 = vmatpush2.msra.mxu0 0.0
          %486 = vmatprep.subr.mxu0 0.0
          %487 = vmatpush2.msra.mxu0 0.0
          %488 = vmatprep.subr.mxu0 0.0
          %489 = vmatpush2.msra.mxu0 0.0
          %490 = vmatprep.subr.mxu0 0.0
          %491 = vmatpush2.msra.mxu0 0.0
          %492 = vmatprep.subr.mxu0 0.0
          %493 = vmatpush2.msra.mxu0 0.0
          %494 = vmatprep.subr.mxu0 0.0
          %495 = vmatpush2.msra.mxu0 0.0
          %496 = vmatprep.subr.mxu0 0.0
          %497 = vmatpush2.msra.mxu0 0.0
          %498 = vmatprep.subr.mxu0 0.0
          %499 = vmatpush2.msra.mxu0 0.0
          %500 = vmatprep.mubr.f32.mxu0 0.0
          %501 = vmatmul.mubr.f32.gmra.mxu0 %v425
          %v502 = vpop.f32.mrf.mxu0
          %v503 = vadd.f32 0.0, %v502
          %v504 = vpop.f32.mrf.mxu0
          %505 = vmatprep.mubr.f32.mxu0 0.0
          %506 = vmatmul.mubr.f32.gmra.mxu0 %v428
          %v507 = vpop.f32.mrf.mxu0
          %v508 = vadd.f32 0.0, %v507
          %v509 = vpop.f32.mrf.mxu0
          %510 = vmatprep.mubr.f32.mxu0 0.0
          %511 = vmatmul.mubr.f32.gmra.mxu0 %v431
          %v512 = vpop.f32.mrf.mxu0
          %v513 = vadd.f32 0.0, %v512
          %v514 = vpop.f32.mrf.mxu0
          %515 = vmatprep.mubr.f32.mxu0 0.0
          %516 = vmatmul.mubr.f32.gmra.mxu0 %v434
          %v517 = vpop.f32.mrf.mxu0
          %v518 = vadd.f32 0.0, %v517
          %v519 = vpop.f32.mrf.mxu0
          %520 = vdwg.mxu0
          %522 = vset.pattern.permute.xlu0 0
          %523 = vperm.xlu0 %522, %v503
          %v524 = vpop.permute.xlu0 %523
          %527 = vset.pattern.permute.xlu0 0
          %528 = vperm.xlu0 %527, %v508
          %v529 = vpop.permute.xlu0 %528
          %532 = vset.pattern.permute.xlu0 0
          %533 = vperm.xlu0 %532, %v513
          %v534 = vpop.permute.xlu0 %533
          %537 = vset.pattern.permute.xlu0 0
          %538 = vperm.xlu0 %537, %v518
          %v539 = vpop.permute.xlu0 %538
          %v541 = vsub.f32 %v399, %v524
          %v542 = vsub.f32 %v400, %v524
          %v543 = vsub.f32 %v401, %v529
          %v544 = vsub.f32 %v402, %v529
          %v545 = vsub.f32 %v403, %v534
          %v546 = vsub.f32 %v404, %v534
          %v547 = vsub.f32 %v405, %v539
          %v548 = vsub.f32 %v406, %v539
          %v549 = vmul.f32 %v541, %v541
          %v550 = vmul.f32 %v542, %v542
          %v551 = vmul.f32 %v543, %v543
          %v552 = vmul.f32 %v544, %v544
          %v553 = vmul.f32 %v545, %v545
          %v554 = vmul.f32 %v546, %v546
          %v555 = vmul.f32 %v547, %v547
          %v556 = vmul.f32 %v548, %v548
          %v557 = vadd.f32 %v549, %v550
          %558 = vadd.xlane.f32.xlu0 %v557
          %v559 = vpop.xlane.xlu0 %558
          %v560 = vadd.f32 %v551, %v552
          %561 = vadd.xlane.f32.xlu0 %v560
          %v562 = vpop.xlane.xlu0 %561
          %v563 = vadd.f32 %v553, %v554
          %564 = vadd.xlane.f32.xlu0 %v563
          %v565 = vpop.xlane.xlu0 %564
          %v566 = vadd.f32 %v555, %v556
          %567 = vadd.xlane.f32.xlu0 %v566
          %v568 = vpop.xlane.xlu0 %567
          %569 = vmatprep.subr.mxu0 0.0
          %570 = vmatpush1.msra.mxu0 0.0
          %571 = vmatprep.subr.mxu0 0.0
          %572 = vmatpush1.msra.mxu0 0.0
          %573 = vmatprep.subr.mxu0 0.0
          %574 = vmatpush1.msra.mxu0 0.0
          %575 = vmatprep.subr.mxu0 0.0
          %576 = vmatpush1.msra.mxu0 0.0
          %577 = vmatprep.subr.mxu0 0.0
          %578 = vmatpush1.msra.mxu0 0.0
          %579 = vmatprep.subr.mxu0 0.0
          %580 = vmatpush1.msra.mxu0 0.0
          %581 = vmatprep.subr.mxu0 0.0
          %582 = vmatpush1.msra.mxu0 0.0
          %583 = vmatprep.subr.mxu0 0.0
          %584 = vmatpush1.msra.mxu0 0.0
          %585 = vmatprep.subr.mxu0 0.0
          %586 = vmatpush1.msra.mxu0 0.0
          %587 = vmatprep.subr.mxu0 0.0
          %588 = vmatpush1.msra.mxu0 0.0
          %589 = vmatprep.subr.mxu0 0.0
          %590 = vmatpush1.msra.mxu0 0.0
          %591 = vmatprep.subr.mxu0 0.0
          %592 = vmatpush1.msra.mxu0 0.0
          %593 = vmatprep.subr.mxu0 0.0
          %594 = vmatpush1.msra.mxu0 %v568
          %595 = vmatprep.subr.mxu0 0.0
          %596 = vmatpush1.msra.mxu0 %v565
          %597 = vmatprep.subr.mxu0 0.0
          %598 = vmatpush1.msra.mxu0 %v562
          %599 = vmatprep.subr.mxu0 0.0
          %600 = vmatpush1.msra.mxu0 %v559
          %601 = vmatprep.subr.mxu0 0.0
          %602 = vmatpush2.msra.mxu0 0.0
          %603 = vmatprep.subr.mxu0 0.0
          %604 = vmatpush2.msra.mxu0 0.0
          %605 = vmatprep.subr.mxu0 0.0
          %606 = vmatpush2.msra.mxu0 0.0
          %607 = vmatprep.subr.mxu0 0.0
          %608 = vmatpush2.msra.mxu0 0.0
          %609 = vmatprep.subr.mxu0 0.0
          %610 = vmatpush2.msra.mxu0 0.0
          %611 = vmatprep.subr.mxu0 0.0
          %612 = vmatpush2.msra.mxu0 0.0
          %613 = vmatprep.subr.mxu0 0.0
          %614 = vmatpush2.msra.mxu0 0.0
          %615 = vmatprep.subr.mxu0 0.0
          %616 = vmatpush2.msra.mxu0 0.0
          %617 = vmatprep.subr.mxu0 0.0
          %618 = vmatpush2.msra.mxu0 0.0
          %619 = vmatprep.subr.mxu0 0.0
          %620 = vmatpush2.msra.mxu0 0.0
          %621 = vmatprep.subr.mxu0 0.0
          %622 = vmatpush2.msra.mxu0 0.0
          %623 = vmatprep.subr.mxu0 0.0
          %624 = vmatpush2.msra.mxu0 0.0
          %625 = vmatprep.subr.mxu0 0.0
          %626 = vmatpush2.msra.mxu0 0.0
          %627 = vmatprep.subr.mxu0 0.0
          %628 = vmatpush2.msra.mxu0 0.0
          %629 = vmatprep.subr.mxu0 0.0
          %630 = vmatpush2.msra.mxu0 0.0
          %631 = vmatprep.subr.mxu0 0.0
          %632 = vmatpush2.msra.mxu0 0.0
          %633 = vmatprep.mubr.f32.mxu0 0.0
          %634 = vmatmul.mubr.f32.gmra.mxu0 %v425
          %v635 = vpop.f32.mrf.mxu0
          %v636 = vadd.f32 1e-05, %v635
          %v637 = vpop.f32.mrf.mxu0
          %638 = vmatprep.mubr.f32.mxu0 0.0
          %639 = vmatmul.mubr.f32.gmra.mxu0 %v428
          %v640 = vpop.f32.mrf.mxu0
          %v641 = vadd.f32 1e-05, %v640
          %v642 = vpop.f32.mrf.mxu0
          %643 = vmatprep.mubr.f32.mxu0 0.0
          %644 = vmatmul.mubr.f32.gmra.mxu0 %v431
          %v645 = vpop.f32.mrf.mxu0
          %v646 = vadd.f32 1e-05, %v645
          %v647 = vpop.f32.mrf.mxu0
          %648 = vmatprep.mubr.f32.mxu0 0.0
          %649 = vmatmul.mubr.f32.gmra.mxu0 %v434
          %v650 = vpop.f32.mrf.mxu0
          %v651 = vadd.f32 1e-05, %v650
          %v652 = vpop.f32.mrf.mxu0
          %653 = vdwg.mxu0
          %v654 = vrsqrt.pop %v636
          %v655 = vrsqrt.pop %v641
          %v656 = vrsqrt.pop %v646
          %v657 = vrsqrt.pop %v651
          %659 = vset.pattern.permute.xlu0 0
          %660 = vperm.xlu0 %659, %v654
          %v661 = vpop.permute.xlu0 %660
          %664 = vset.pattern.permute.xlu0 0
          %665 = vperm.xlu0 %664, %v655
          %v666 = vpop.permute.xlu0 %665
          %669 = vset.pattern.permute.xlu0 0
          %670 = vperm.xlu0 %669, %v656
          %v671 = vpop.permute.xlu0 %670
          %674 = vset.pattern.permute.xlu0 0
          %675 = vperm.xlu0 %674, %v657
          %v676 = vpop.permute.xlu0 %675
          %v678 = vmul.f32 %v541, %v661
          %v679 = vmul.f32 %v542, %v661
          %v680 = vmul.f32 %v543, %v666
          %v681 = vmul.f32 %v544, %v666
          %v682 = vmul.f32 %v545, %v671
          %v683 = vmul.f32 %v546, %v671
          %v684 = vmul.f32 %v547, %v676
          %v685 = vmul.f32 %v548, %v676
          %v686 = vld [vmem:[%s2] sm:$0xff]
          %v687 = vld [vmem:[%s2 + $0x8] sm:$0xff]
          %v688 = vld [vmem:[%s2 + $0x10] sm:$0xff]
          %v689 = vld [vmem:[%s2 + $0x18] sm:$0xff]
          %691 = vset.pattern.permute.xlu0 0
          %692 = vperm.xlu0 %691, %v686
          %v693 = vpop.permute.xlu0 %692
          %696 = vset.pattern.permute.xlu0 0
          %697 = vperm.xlu0 %696, %v687
          %v698 = vpop.permute.xlu0 %697
          %701 = vset.pattern.permute.xlu0 0
          %702 = vperm.xlu0 %701, %v688
          %v703 = vpop.permute.xlu0 %702
          %706 = vset.pattern.permute.xlu0 0
          %707 = vperm.xlu0 %706, %v689
          %v708 = vpop.permute.xlu0 %707
          %v710 = vmul.f32 %v678, %v693
          %v711 = vmul.f32 %v679, %v693
          %v712 = vmul.f32 %v680, %v698
          %v713 = vmul.f32 %v681, %v698
          %v714 = vmul.f32 %v682, %v703
          %v715 = vmul.f32 %v683, %v703
          %v716 = vmul.f32 %v684, %v708
          %v717 = vmul.f32 %v685, %v708
          %v718 = vld [vmem:[%s3] sm:$0xff]
          %v719 = vld [vmem:[%s3 + $0x8] sm:$0xff]
          %v720 = vld [vmem:[%s3 + $0x10] sm:$0xff]
          %v721 = vld [vmem:[%s3 + $0x18] sm:$0xff]
          %723 = vset.pattern.permute.xlu0 0
          %724 = vperm.xlu0 %723, %v718
          %v725 = vpop.permute.xlu0 %724
          %728 = vset.pattern.permute.xlu0 0
          %729 = vperm.xlu0 %728, %v719
          %v730 = vpop.permute.xlu0 %729
          %733 = vset.pattern.permute.xlu0 0
          %734 = vperm.xlu0 %733, %v720
          %v735 = vpop.permute.xlu0 %734
          %738 = vset.pattern.permute.xlu0 0
          %739 = vperm.xlu0 %738, %v721
          %v740 = vpop.permute.xlu0 %739
          %v742 = vadd.f32 %v710, %v725
          %v743 = vadd.f32 %v711, %v725
          %v744 = vadd.f32 %v712, %v730
          %v745 = vadd.f32 %v713, %v730
          %v746 = vadd.f32 %v714, %v735
          %v747 = vadd.f32 %v715, %v735
          %v748 = vadd.f32 %v716, %v740
          %v749 = vadd.f32 %v717, %v740
          %v750 = vld [vmem:[%s4] sm:$0xff]
          %v751 = vld [vmem:[%s4 + $0x8] sm:$0xff]
          %v752 = vld [vmem:[%s4 + $0x10] sm:$0xff]
          %v753 = vld [vmem:[%s4 + $0x18] sm:$0xff]
          %v755 = vsel %vm423, %v750, 0
          %v758 = vsel %vm423, %v751, 0
          %v761 = vsel %vm423, %v752, 0
          %v764 = vsel %vm423, %v753, 0
          %766 = vmatprep.subr.mxu0 0.0
          %767 = vmatpush1.msra.mxu0 0.0
          %768 = vmatprep.subr.mxu0 0.0
          %769 = vmatpush1.msra.mxu0 0.0
          %770 = vmatprep.subr.mxu0 0.0
          %771 = vmatpush1.msra.mxu0 0.0
          %772 = vmatprep.subr.mxu0 0.0
          %773 = vmatpush1.msra.mxu0 0.0
          %774 = vmatprep.subr.mxu0 0.0
          %775 = vmatpush1.msra.mxu0 0.0
          %776 = vmatprep.subr.mxu0 0.0
          %777 = vmatpush1.msra.mxu0 0.0
          %778 = vmatprep.subr.mxu0 0.0
          %779 = vmatpush1.msra.mxu0 0.0
          %780 = vmatprep.subr.mxu0 0.0
          %781 = vmatpush1.msra.mxu0 0.0
          %782 = vmatprep.subr.mxu0 0.0
          %783 = vmatpush1.msra.mxu0 0.0
          %784 = vmatprep.subr.mxu0 0.0
          %785 = vmatpush1.msra.mxu0 0.0
          %786 = vmatprep.subr.mxu0 0.0
          %787 = vmatpush1.msra.mxu0 0.0
          %788 = vmatprep.subr.mxu0 0.0
          %789 = vmatpush1.msra.mxu0 0.0
          %790 = vmatprep.subr.mxu0 %v749
          %791 = vmatpush1.msra.mxu0 %v748
          %792 = vmatprep.subr.mxu0 %v747
          %793 = vmatpush1.msra.mxu0 %v746
          %794 = vmatprep.subr.mxu0 %v745
          %795 = vmatpush1.msra.mxu0 %v744
          %796 = vmatprep.subr.mxu0 %v743
          %797 = vmatpush1.msra.mxu0 %v742
          %798 = vmatprep.subr.mxu0 0.0
          %799 = vmatpush2.msra.mxu0 0.0
          %800 = vmatprep.subr.mxu0 0.0
          %801 = vmatpush2.msra.mxu0 0.0
          %802 = vmatprep.subr.mxu0 0.0
          %803 = vmatpush2.msra.mxu0 0.0
          %804 = vmatprep.subr.mxu0 0.0
          %805 = vmatpush2.msra.mxu0 0.0
          %806 = vmatprep.subr.mxu0 0.0
          %807 = vmatpush2.msra.mxu0 0.0
          %808 = vmatprep.subr.mxu0 0.0
          %809 = vmatpush2.msra.mxu0 0.0
          %810 = vmatprep.subr.mxu0 0.0
          %811 = vmatpush2.msra.mxu0 0.0
          %812 = vmatprep.subr.mxu0 0.0
          %813 = vmatpush2.msra.mxu0 0.0
          %814 = vmatprep.subr.mxu0 0.0
          %815 = vmatpush2.msra.mxu0 0.0
          %816 = vmatprep.subr.mxu0 0.0
          %817 = vmatpush2.msra.mxu0 0.0
          %818 = vmatprep.subr.mxu0 0.0
          %819 = vmatpush2.msra.mxu0 0.0
          %820 = vmatprep.subr.mxu0 0.0
          %821 = vmatpush2.msra.mxu0 0.0
          %822 = vmatprep.subr.mxu0 0.0
          %823 = vmatpush2.msra.mxu0 0.0
          %824 = vmatprep.subr.mxu0 0.0
          %825 = vmatpush2.msra.mxu0 0.0
          %826 = vmatprep.subr.mxu0 0.0
          %827 = vmatpush2.msra.mxu0 0.0
          %828 = vmatprep.subr.mxu0 0.0
          %829 = vmatpush2.msra.mxu0 0.0
          %830 = vmatprep.mubr.f32.mxu0 0.0
          %831 = vmatmul.mubr.f32.gmra.mxu0 %v755
          %v832 = vpop.f32.mrf.mxu0
          %v833 = vadd.f32 0.0, %v832
          %v834 = vpop.f32.mrf.mxu0
          %v835 = vadd.f32 0.0, %v834
          %836 = vmatprep.mubr.f32.mxu0 0.0
          %837 = vmatmul.mubr.f32.gmra.mxu0 %v758
          %v838 = vpop.f32.mrf.mxu0
          %v839 = vadd.f32 0.0, %v838
          %v840 = vpop.f32.mrf.mxu0
          %v841 = vadd.f32 0.0, %v840
          %842 = vmatprep.mubr.f32.mxu0 0.0
          %843 = vmatmul.mubr.f32.gmra.mxu0 %v761
          %v844 = vpop.f32.mrf.mxu0
          %v845 = vadd.f32 0.0, %v844
          %v846 = vpop.f32.mrf.mxu0
          %v847 = vadd.f32 0.0, %v846
          %848 = vmatprep.mubr.f32.mxu0 0.0
          %849 = vmatmul.mubr.f32.gmra.mxu0 %v764
          %v850 = vpop.f32.mrf.mxu0
          %v851 = vadd.f32 0.0, %v850
          %v852 = vpop.f32.mrf.mxu0
          %v853 = vadd.f32 0.0, %v852
          %854 = vdwg.mxu0
          %v855 = vpack.c.bf16 %v839, %v833
          %v856 = vpack.c.bf16 %v841, %v835
          %v857 = vpack.c.bf16 %v851, %v845
          %v858 = vpack.c.bf16 %v853, %v847
          %v863 = vunpack.c.l.b16 %v855
          %v864 = vunpack.c.l.b16 %v856
          %v865 = vunpack.c.h.b16 %v855
          %v866 = vunpack.c.h.b16 %v856
          %v867 = vunpack.c.l.b16 %v857
          %v868 = vunpack.c.l.b16 %v858
          %v869 = vunpack.c.h.b16 %v857
          %v870 = vunpack.c.h.b16 %v858
          %v871 = vpack.c.b16 %v864, %v863
          %v872 = vpack.c.b16 %v866, %v865
          %v873 = vpack.c.b16 %v868, %v867
          %v874 = vpack.c.b16 %v870, %v869
          %879 = vst [vmem:[#allocation2] sm:$0xff] %v871
          %880 = vst [vmem:[#allocation2 + $0x8] sm:$0xff] %v872
          %881 = vst [vmem:[#allocation2 + $0x10] sm:$0xff] %v873
          %882 = vst [vmem:[#allocation2 + $0x18] sm:$0xff] %v874
          %v883 = vld [vmem:[%s5] sm:$0xff]
          %v884 = vld [vmem:[%s5 + $0x8] sm:$0xff]
          %v885 = vld [vmem:[%s5 + $0x10] sm:$0xff]
          %v886 = vld [vmem:[%s5 + $0x18] sm:$0xff]
          %v888 = vsel %vm423, %v883, 0
          %v891 = vsel %vm423, %v884, 0
          %v894 = vsel %vm423, %v885, 0
          %v897 = vsel %vm423, %v886, 0
          %899 = vmatprep.subr.mxu0 0.0
          %900 = vmatpush1.msra.mxu0 0.0
          %901 = vmatprep.subr.mxu0 0.0
          %902 = vmatpush1.msra.mxu0 0.0
          %903 = vmatprep.subr.mxu0 0.0
          %904 = vmatpush1.msra.mxu0 0.0
          %905 = vmatprep.subr.mxu0 0.0
          %906 = vmatpush1.msra.mxu0 0.0
          %907 = vmatprep.subr.mxu0 0.0
          %908 = vmatpush1.msra.mxu0 0.0
          %909 = vmatprep.subr.mxu0 0.0
          %910 = vmatpush1.msra.mxu0 0.0
          %911 = vmatprep.subr.mxu0 0.0
          %912 = vmatpush1.msra.mxu0 0.0
          %913 = vmatprep.subr.mxu0 0.0
          %914 = vmatpush1.msra.mxu0 0.0
          %915 = vmatprep.subr.mxu0 0.0
          %916 = vmatpush1.msra.mxu0 0.0
          %917 = vmatprep.subr.mxu0 0.0
          %918 = vmatpush1.msra.mxu0 0.0
          %919 = vmatprep.subr.mxu0 0.0
          %920 = vmatpush1.msra.mxu0 0.0
          %921 = vmatprep.subr.mxu0 0.0
          %922 = vmatpush1.msra.mxu0 0.0
          %923 = vmatprep.subr.mxu0 %v749
          %924 = vmatpush1.msra.mxu0 %v748
          %925 = vmatprep.subr.mxu0 %v747
          %926 = vmatpush1.msra.mxu0 %v746
          %927 = vmatprep.subr.mxu0 %v745
          %928 = vmatpush1.msra.mxu0 %v744
          %929 = vmatprep.subr.mxu0 %v743
          %930 = vmatpush1.msra.mxu0 %v742
          %931 = vmatprep.subr.mxu0 0.0
          %932 = vmatpush2.msra.mxu0 0.0
          %933 = vmatprep.subr.mxu0 0.0
          %934 = vmatpush2.msra.mxu0 0.0
          %935 = vmatprep.subr.mxu0 0.0
          %936 = vmatpush2.msra.mxu0 0.0
          %937 = vmatprep.subr.mxu0 0.0
          %938 = vmatpush2.msra.mxu0 0.0
          %939 = vmatprep.subr.mxu0 0.0
          %940 = vmatpush2.msra.mxu0 0.0
          %941 = vmatprep.subr.mxu0 0.0
          %942 = vmatpush2.msra.mxu0 0.0
          %943 = vmatprep.subr.mxu0 0.0
          %944 = vmatpush2.msra.mxu0 0.0
          %945 = vmatprep.subr.mxu0 0.0
          %946 = vmatpush2.msra.mxu0 0.0
          %947 = vmatprep.subr.mxu0 0.0
          %948 = vmatpush2.msra.mxu0 0.0
          %949 = vmatprep.subr.mxu0 0.0
          %950 = vmatpush2.msra.mxu0 0.0
          %951 = vmatprep.subr.mxu0 0.0
          %952 = vmatpush2.msra.mxu0 0.0
          %953 = vmatprep.subr.mxu0 0.0
          %954 = vmatpush2.msra.mxu0 0.0
          %955 = vmatprep.subr.mxu0 0.0
          %956 = vmatpush2.msra.mxu0 0.0
          %957 = vmatprep.subr.mxu0 0.0
          %958 = vmatpush2.msra.mxu0 0.0
          %959 = vmatprep.subr.mxu0 0.0
          %960 = vmatpush2.msra.mxu0 0.0
          %961 = vmatprep.subr.mxu0 0.0
          %962 = vmatpush2.msra.mxu0 0.0
          %963 = vmatprep.mubr.f32.mxu0 0.0
          %964 = vmatmul.mubr.f32.gmra.mxu0 %v888
          %v965 = vpop.f32.mrf.mxu0
          %v966 = vadd.f32 0.0, %v965
          %v967 = vpop.f32.mrf.mxu0
          %v968 = vadd.f32 0.0, %v967
          %969 = vmatprep.mubr.f32.mxu0 0.0
          %970 = vmatmul.mubr.f32.gmra.mxu0 %v891
          %v971 = vpop.f32.mrf.mxu0
          %v972 = vadd.f32 0.0, %v971
          %v973 = vpop.f32.mrf.mxu0
          %v974 = vadd.f32 0.0, %v973
          %975 = vmatprep.mubr.f32.mxu0 0.0
          %976 = vmatmul.mubr.f32.gmra.mxu0 %v894
          %v977 = vpop.f32.mrf.mxu0
          %v978 = vadd.f32 0.0, %v977
          %v979 = vpop.f32.mrf.mxu0
          %v980 = vadd.f32 0.0, %v979
          %981 = vmatprep.mubr.f32.mxu0 0.0
          %982 = vmatmul.mubr.f32.gmra.mxu0 %v897
          %v983 = vpop.f32.mrf.mxu0
          %v984 = vadd.f32 0.0, %v983
          %v985 = vpop.f32.mrf.mxu0
          %v986 = vadd.f32 0.0, %v985
          %987 = vdwg.mxu0
          %v988 = vpack.c.bf16 %v972, %v966
          %v989 = vpack.c.bf16 %v974, %v968
          %v990 = vpack.c.bf16 %v984, %v978
          %v991 = vpack.c.bf16 %v986, %v980
          %v996 = vunpack.c.l.b16 %v988
          %v997 = vunpack.c.l.b16 %v989
          %v998 = vunpack.c.h.b16 %v988
          %v999 = vunpack.c.h.b16 %v989
          %v1000 = vunpack.c.l.b16 %v990
          %v1001 = vunpack.c.l.b16 %v991
          %v1002 = vunpack.c.h.b16 %v990
          %v1003 = vunpack.c.h.b16 %v991
          %v1004 = vpack.c.b16 %v997, %v996
          %v1005 = vpack.c.b16 %v999, %v998
          %v1006 = vpack.c.b16 %v1001, %v1000
          %v1007 = vpack.c.b16 %v1003, %v1002
          %1012 = vst [vmem:[#allocation3] sm:$0xff] %v1004
          %1013 = vst [vmem:[#allocation3 + $0x8] sm:$0xff] %v1005
          %1014 = vst [vmem:[#allocation3 + $0x10] sm:$0xff] %v1006
          %1015 = vst [vmem:[#allocation3 + $0x18] sm:$0xff] %v1007
          %v1016 = vld [vmem:[#allocation9] sm:$0xff]
          %v1017 = vld [vmem:[#allocation9 + $0x8] sm:$0xff]
          %v1018 = vld [vmem:[#allocation9 + $0x10] sm:$0xff]
          %v1019 = vld [vmem:[#allocation9 + $0x18] sm:$0xff]
          %v1021 = vsel %vm423, %v1016, 0
          %v1024 = vsel %vm423, %v1017, 0
          %v1027 = vsel %vm423, %v1018, 0
          %v1030 = vsel %vm423, %v1019, 0
          %1032 = vmatprep.subr.mxu0 0.0
          %1033 = vmatpush1.msra.mxu0 0.0
          %1034 = vmatprep.subr.mxu0 0.0
          %1035 = vmatpush1.msra.mxu0 0.0
          %1036 = vmatprep.subr.mxu0 0.0
          %1037 = vmatpush1.msra.mxu0 0.0
          %1038 = vmatprep.subr.mxu0 0.0
          %1039 = vmatpush1.msra.mxu0 0.0
          %1040 = vmatprep.subr.mxu0 0.0
          %1041 = vmatpush1.msra.mxu0 0.0
          %1042 = vmatprep.subr.mxu0 0.0
          %1043 = vmatpush1.msra.mxu0 0.0
          %1044 = vmatprep.subr.mxu0 0.0
          %1045 = vmatpush1.msra.mxu0 0.0
          %1046 = vmatprep.subr.mxu0 0.0
          %1047 = vmatpush1.msra.mxu0 0.0
          %1048 = vmatprep.subr.mxu0 0.0
          %1049 = vmatpush1.msra.mxu0 0.0
          %1050 = vmatprep.subr.mxu0 0.0
          %1051 = vmatpush1.msra.mxu0 0.0
          %1052 = vmatprep.subr.mxu0 0.0
          %1053 = vmatpush1.msra.mxu0 0.0
          %1054 = vmatprep.subr.mxu0 0.0
          %1055 = vmatpush1.msra.mxu0 0.0
          %1056 = vmatprep.subr.mxu0 %v749
          %1057 = vmatpush1.msra.mxu0 %v748
          %1058 = vmatprep.subr.mxu0 %v747
          %1059 = vmatpush1.msra.mxu0 %v746
          %1060 = vmatprep.subr.mxu0 %v745
          %1061 = vmatpush1.msra.mxu0 %v744
          %1062 = vmatprep.subr.mxu0 %v743
          %1063 = vmatpush1.msra.mxu0 %v742
          %1064 = vmatprep.subr.mxu0 0.0
          %1065 = vmatpush2.msra.mxu0 0.0
          %1066 = vmatprep.subr.mxu0 0.0
          %1067 = vmatpush2.msra.mxu0 0.0
          %1068 = vmatprep.subr.mxu0 0.0
          %1069 = vmatpush2.msra.mxu0 0.0
          %1070 = vmatprep.subr.mxu0 0.0
          %1071 = vmatpush2.msra.mxu0 0.0
          %1072 = vmatprep.subr.mxu0 0.0
          %1073 = vmatpush2.msra.mxu0 0.0
          %1074 = vmatprep.subr.mxu0 0.0
          %1075 = vmatpush2.msra.mxu0 0.0
          %1076 = vmatprep.subr.mxu0 0.0
          %1077 = vmatpush2.msra.mxu0 0.0
          %1078 = vmatprep.subr.mxu0 0.0
          %1079 = vmatpush2.msra.mxu0 0.0
          %1080 = vmatprep.subr.mxu0 0.0
          %1081 = vmatpush2.msra.mxu0 0.0
          %1082 = vmatprep.subr.mxu0 0.0
          %1083 = vmatpush2.msra.mxu0 0.0
          %1084 = vmatprep.subr.mxu0 0.0
          %1085 = vmatpush2.msra.mxu0 0.0
          %1086 = vmatprep.subr.mxu0 0.0
          %1087 = vmatpush2.msra.mxu0 0.0
          %1088 = vmatprep.subr.mxu0 0.0
          %1089 = vmatpush2.msra.mxu0 0.0
          %1090 = vmatprep.subr.mxu0 0.0
          %1091 = vmatpush2.msra.mxu0 0.0
          %1092 = vmatprep.subr.mxu0 0.0
          %1093 = vmatpush2.msra.mxu0 0.0
          %1094 = vmatprep.subr.mxu0 0.0
          %1095 = vmatpush2.msra.mxu0 0.0
          %1096 = vmatprep.mubr.f32.mxu0 0.0
          %1097 = vmatmul.mubr.f32.gmra.mxu0 %v1021
          %v1098 = vpop.f32.mrf.mxu0
          %v1099 = vadd.f32 0.0, %v1098
          %v1100 = vpop.f32.mrf.mxu0
          %v1101 = vadd.f32 0.0, %v1100
          %1102 = vmatprep.mubr.f32.mxu0 0.0
          %1103 = vmatmul.mubr.f32.gmra.mxu0 %v1024
          %v1104 = vpop.f32.mrf.mxu0
          %v1105 = vadd.f32 0.0, %v1104
          %v1106 = vpop.f32.mrf.mxu0
          %v1107 = vadd.f32 0.0, %v1106
          %1108 = vmatprep.mubr.f32.mxu0 0.0
          %1109 = vmatmul.mubr.f32.gmra.mxu0 %v1027
          %v1110 = vpop.f32.mrf.mxu0
          %v1111 = vadd.f32 0.0, %v1110
          %v1112 = vpop.f32.mrf.mxu0
          %v1113 = vadd.f32 0.0, %v1112
          %1114 = vmatprep.mubr.f32.mxu0 0.0
          %1115 = vmatmul.mubr.f32.gmra.mxu0 %v1030
          %v1116 = vpop.f32.mrf.mxu0
          %v1117 = vadd.f32 0.0, %v1116
          %v1118 = vpop.f32.mrf.mxu0
          %v1119 = vadd.f32 0.0, %v1118
          %1120 = vdwg.mxu0
          %v1121 = vpack.c.bf16 %v1105, %v1099
          %v1122 = vpack.c.bf16 %v1107, %v1101
          %v1123 = vpack.c.bf16 %v1117, %v1111
          %v1124 = vpack.c.bf16 %v1119, %v1113
          %v1129 = vunpack.c.l.b16 %v1121
          %v1130 = vunpack.c.l.b16 %v1122
          %v1131 = vunpack.c.h.b16 %v1121
          %v1132 = vunpack.c.h.b16 %v1122
          %v1133 = vunpack.c.l.b16 %v1123
          %v1134 = vunpack.c.l.b16 %v1124
          %v1135 = vunpack.c.h.b16 %v1123
          %v1136 = vunpack.c.h.b16 %v1124
          %v1137 = vpack.c.b16 %v1130, %v1129
          %v1138 = vpack.c.b16 %v1132, %v1131
          %v1139 = vpack.c.b16 %v1134, %v1133
          %v1140 = vpack.c.b16 %v1136, %v1135
          %1145 = vst [vmem:[#allocation4] sm:$0xff] %v1137
          %1146 = vst [vmem:[#allocation4 + $0x8] sm:$0xff] %v1138
          %1147 = vst [vmem:[#allocation4 + $0x10] sm:$0xff] %v1139
          %1148 = vst [vmem:[#allocation4 + $0x18] sm:$0xff] %v1140
        $region72: #{tpu_custom_call.1} parent=55 // pred_fallthru
          _
        %s1149 = smul.u32 %s32, 128
        %s1150 = sshra.s32 %s1149, 7
        %s1151 = sand.u32 %s1149, 127
        %s1152 = smul.addr %s1150, 4
        %s1153 = scalar_lea.vmem [#allocation2], %s1152
        %v1154 = vld [vmem:[%s1153] sm:$0xf]
        %v1155 = vld [vmem:[%s1153 + $0x8] sm:$0xf]
        %v1156 = vld [vmem:[%s1153 + $0x10] sm:$0xf]
        %v1157 = vld [vmem:[%s1153 + $0x18] sm:$0xf]
        %v1158 = vld [vmem:[#allocation3] sm:$0xff]
        %v1159 = vld [vmem:[#allocation3 + $0x8] sm:$0xff]
        %v1160 = vld [vmem:[#allocation4] sm:$0xff]
        %v1161 = vld [vmem:[#allocation4 + $0x8] sm:$0xff]
        %v1164 = vunpack.c.l.b16 %v1154
        %v1165 = vunpack.c.l.b16 %v1155
        %v1166 = vpack.c.b16 %v1165, %v1164
        %1168 = vxpose.xlu0.c.b16.start [1/8] %v1166, 128
        %1169 = vxpose.xlu0.c.b16.cont [2/8] 0, 128
        %1170 = vxpose.xlu0.c.b16.cont [3/8] 0, 128
        %1171 = vxpose.xlu0.c.b16.cont [4/8] 0, 128
        %1172 = vxpose.xlu0.c.b16.cont [5/8] 0, 128
        %1173 = vxpose.xlu0.c.b16.cont [6/8] 0, 128
        %1174 = vxpose.xlu0.c.b16.cont [7/8] 0, 128
        %1175 = vxpose.xlu0.c.b16.end [8/8] 0, 128
        %v1176 = vpop.trf.xlu0
        %v1177 = vpop.trf.xlu0
        %v1178 = vpop.trf.xlu0
        %v1179 = vpop.trf.xlu0
        %v1180 = vpop.trf.xlu0
        %v1181 = vpop.trf.xlu0
        %v1182 = vpop.trf.xlu0
        %v1183 = vpop.trf.xlu0
        %v1186 = vunpack.c.l.b16 %v1158
        %v1187 = vunpack.c.h.b16 %v1158
        %v1188 = vunpack.c.l.b16 %v1159
        %v1189 = vunpack.c.h.b16 %v1159
        %v1190 = vpack.c.b16 %v1188, %v1186
        %v1191 = vpack.c.b16 %v1189, %v1187
        %vm1194 = vcmask 130048
        %v1196 = vsel %vm1194, %v1176, 0
        %v1199 = vsel %vm1194, %v1177, 0
        %v1202 = vsel %vm1194, %v1178, 0
        %v1205 = vsel %vm1194, %v1179, 0
        %v1208 = vsel %vm1194, %v1180, 0
        %v1211 = vsel %vm1194, %v1181, 0
        %v1214 = vsel %vm1194, %v1182, 0
        %v1217 = vsel %vm1194, %v1183, 0
        %1219 = vmatprep.subr.bf16.mxu0 0
        %1220 = vmatpush1.bf16.msra.mxu0 0
        %1221 = vmatprep.subr.bf16.mxu0 0
        %1222 = vmatpush1.bf16.msra.mxu0 0
        %1223 = vmatprep.subr.bf16.mxu0 0
        %1224 = vmatpush1.bf16.msra.mxu0 0
        %1225 = vmatprep.subr.bf16.mxu0 0
        %1226 = vmatpush1.bf16.msra.mxu0 0
        %1227 = vmatprep.subr.bf16.mxu0 0
        %1228 = vmatpush1.bf16.msra.mxu0 0
        %1229 = vmatprep.subr.bf16.mxu0 0
        %1230 = vmatpush1.bf16.msra.mxu0 0
        %1231 = vmatprep.subr.bf16.mxu0 0
        %1232 = vmatpush1.bf16.msra.mxu0 0
        %1233 = vmatprep.subr.bf16.mxu0 %v1191
        %1234 = vmatpush1.bf16.msra.mxu0 %v1190
        %1235 = vmatprep.subr.bf16.mxu0 0
        %1236 = vmatpush2.bf16.msra.mxu0 0
        %1237 = vmatprep.subr.bf16.mxu0 0
        %1238 = vmatpush2.bf16.msra.mxu0 0
        %1239 = vmatprep.subr.bf16.mxu0 0
        %1240 = vmatpush2.bf16.msra.mxu0 0
        %1241 = vmatprep.subr.bf16.mxu0 0
        %1242 = vmatpush2.bf16.msra.mxu0 0
        %1243 = vmatprep.subr.bf16.mxu0 0
        %1244 = vmatpush2.bf16.msra.mxu0 0
        %1245 = vmatprep.subr.bf16.mxu0 0
        %1246 = vmatpush2.bf16.msra.mxu0 0
        %1247 = vmatprep.subr.bf16.mxu0 0
        %1248 = vmatpush2.bf16.msra.mxu0 0
        %1249 = vmatprep.subr.bf16.mxu0 0
        %1250 = vmatpush2.bf16.msra.mxu0 0
        %1251 = vmatprep.mubr.bf16.mxu0 0
        %1252 = vmatmul.mubr.bf16.gmra.mxu0 %v1196
        %v1253 = vpop.f32.mrf.mxu0
        %v1254 = vadd.f32 0.0, %v1253
        %v1255 = vpop.f32.mrf.mxu0
        %v1256 = vadd.f32 0.0, %v1255
        %v1257 = vpop.f32.mrf.mxu0
        %v1258 = vadd.f32 0.0, %v1257
        %v1259 = vpop.f32.mrf.mxu0
        %v1260 = vadd.f32 0.0, %v1259
        %1261 = vmatprep.mubr.bf16.mxu0 0
        %1262 = vmatmul.mubr.bf16.gmra.mxu0 %v1199
        %v1263 = vpop.f32.mrf.mxu0
        %v1264 = vadd.f32 0.0, %v1263
        %v1265 = vpop.f32.mrf.mxu0
        %v1266 = vadd.f32 0.0, %v1265
        %v1267 = vpop.f32.mrf.mxu0
        %v1268 = vadd.f32 0.0, %v1267
        %v1269 = vpop.f32.mrf.mxu0
        %v1270 = vadd.f32 0.0, %v1269
        %1271 = vmatprep.mubr.bf16.mxu0 0
        %1272 = vmatmul.mubr.bf16.gmra.mxu0 %v1202
        %v1273 = vpop.f32.mrf.mxu0
        %v1274 = vadd.f32 0.0, %v1273
        %v1275 = vpop.f32.mrf.mxu0
        %v1276 = vadd.f32 0.0, %v1275
        %v1277 = vpop.f32.mrf.mxu0
        %v1278 = vadd.f32 0.0, %v1277
        %v1279 = vpop.f32.mrf.mxu0
        %v1280 = vadd.f32 0.0, %v1279
        %1281 = vmatprep.mubr.bf16.mxu0 0
        %1282 = vmatmul.mubr.bf16.gmra.mxu0 %v1205
        %v1283 = vpop.f32.mrf.mxu0
        %v1284 = vadd.f32 0.0, %v1283
        %v1285 = vpop.f32.mrf.mxu0
        %v1286 = vadd.f32 0.0, %v1285
        %v1287 = vpop.f32.mrf.mxu0
        %v1288 = vadd.f32 0.0, %v1287
        %v1289 = vpop.f32.mrf.mxu0
        %v1290 = vadd.f32 0.0, %v1289
        %1291 = vmatprep.mubr.bf16.mxu0 0
        %1292 = vmatmul.mubr.bf16.gmra.mxu0 %v1208
        %v1293 = vpop.f32.mrf.mxu0
        %v1294 = vadd.f32 0.0, %v1293
        %v1295 = vpop.f32.mrf.mxu0
        %v1296 = vadd.f32 0.0, %v1295
        %v1297 = vpop.f32.mrf.mxu0
        %v1298 = vadd.f32 0.0, %v1297
        %v1299 = vpop.f32.mrf.mxu0
        %v1300 = vadd.f32 0.0, %v1299
        %1301 = vmatprep.mubr.bf16.mxu0 0
        %1302 = vmatmul.mubr.bf16.gmra.mxu0 %v1211
        %v1303 = vpop.f32.mrf.mxu0
        %v1304 = vadd.f32 0.0, %v1303
        %v1305 = vpop.f32.mrf.mxu0
        %v1306 = vadd.f32 0.0, %v1305
        %v1307 = vpop.f32.mrf.mxu0
        %v1308 = vadd.f32 0.0, %v1307
        %v1309 = vpop.f32.mrf.mxu0
        %v1310 = vadd.f32 0.0, %v1309
        %1311 = vmatprep.mubr.bf16.mxu0 0
        %1312 = vmatmul.mubr.bf16.gmra.mxu0 %v1214
        %v1313 = vpop.f32.mrf.mxu0
        %v1314 = vadd.f32 0.0, %v1313
        %v1315 = vpop.f32.mrf.mxu0
        %v1316 = vadd.f32 0.0, %v1315
        %v1317 = vpop.f32.mrf.mxu0
        %v1318 = vadd.f32 0.0, %v1317
        %v1319 = vpop.f32.mrf.mxu0
        %v1320 = vadd.f32 0.0, %v1319
        %1321 = vmatprep.mubr.bf16.mxu0 0
        %1322 = vmatmul.mubr.bf16.gmra.mxu0 %v1217
        %v1323 = vpop.f32.mrf.mxu0
        %v1324 = vadd.f32 0.0, %v1323
        %v1325 = vpop.f32.mrf.mxu0
        %v1326 = vadd.f32 0.0, %v1325
        %v1327 = vpop.f32.mrf.mxu0
        %v1328 = vadd.f32 0.0, %v1327
        %v1329 = vpop.f32.mrf.mxu0
        %v1330 = vadd.f32 0.0, %v1329
        %1331 = vdwg.mxu0
        %v1332 = vmax.f32 %v1254, %v1256
        %1333 = vmax.xlane.f32.xlu0 %v1332
        %v1334 = vpop.xlane.xlu0 %1333
        %v1335 = vmax.f32 %v1258, %v1260
        %1336 = vmax.xlane.f32.xlu0 %v1335
        %v1337 = vpop.xlane.xlu0 %1336
        %v1338 = vmax.f32 %v1264, %v1266
        %1339 = vmax.xlane.f32.xlu0 %v1338
        %v1340 = vpop.xlane.xlu0 %1339
        %v1341 = vmax.f32 %v1268, %v1270
        %1342 = vmax.xlane.f32.xlu0 %v1341
        %v1343 = vpop.xlane.xlu0 %1342
        %v1344 = vmax.f32 %v1274, %v1276
        %1345 = vmax.xlane.f32.xlu0 %v1344
        %v1346 = vpop.xlane.xlu0 %1345
        %v1347 = vmax.f32 %v1278, %v1280
        %1348 = vmax.xlane.f32.xlu0 %v1347
        %v1349 = vpop.xlane.xlu0 %1348
        %v1350 = vmax.f32 %v1284, %v1286
        %1351 = vmax.xlane.f32.xlu0 %v1350
        %v1352 = vpop.xlane.xlu0 %1351
        %v1353 = vmax.f32 %v1288, %v1290
        %1354 = vmax.xlane.f32.xlu0 %v1353
        %v1355 = vpop.xlane.xlu0 %1354
        %v1356 = vmax.f32 %v1294, %v1296
        %1357 = vmax.xlane.f32.xlu0 %v1356
        %v1358 = vpop.xlane.xlu0 %1357
        %v1359 = vmax.f32 %v1298, %v1300
        %1360 = vmax.xlane.f32.xlu0 %v1359
        %v1361 = vpop.xlane.xlu0 %1360
        %v1362 = vmax.f32 %v1304, %v1306
        %1363 = vmax.xlane.f32.xlu0 %v1362
        %v1364 = vpop.xlane.xlu0 %1363
        %v1365 = vmax.f32 %v1308, %v1310
        %1366 = vmax.xlane.f32.xlu0 %v1365
        %v1367 = vpop.xlane.xlu0 %1366
        %v1368 = vmax.f32 %v1314, %v1316
        %1369 = vmax.xlane.f32.xlu0 %v1368
        %v1370 = vpop.xlane.xlu0 %1369
        %v1371 = vmax.f32 %v1318, %v1320
        %1372 = vmax.xlane.f32.xlu0 %v1371
        %v1373 = vpop.xlane.xlu0 %1372
        %v1374 = vmax.f32 %v1324, %v1326
        %1375 = vmax.xlane.f32.xlu0 %v1374
        %v1376 = vpop.xlane.xlu0 %1375
        %v1377 = vmax.f32 %v1328, %v1330
        %1378 = vmax.xlane.f32.xlu0 %v1377
        %v1379 = vpop.xlane.xlu0 %1378
        %v1380 = vsub.f32 %v1254, %v1334
        %v1381 = vsub.f32 %v1256, %v1334
        %v1382 = vsub.f32 %v1258, %v1337
        %v1383 = vsub.f32 %v1260, %v1337
        %v1384 = vsub.f32 %v1264, %v1340
        %v1385 = vsub.f32 %v1266, %v1340
        %v1386 = vsub.f32 %v1268, %v1343
        %v1387 = vsub.f32 %v1270, %v1343
        %v1388 = vsub.f32 %v1274, %v1346
        %v1389 = vsub.f32 %v1276, %v1346
        %v1390 = vsub.f32 %v1278, %v1349
        %v1391 = vsub.f32 %v1280, %v1349
        %v1392 = vsub.f32 %v1284, %v1352
        %v1393 = vsub.f32 %v1286, %v1352
        %v1394 = vsub.f32 %v1288, %v1355
        %v1395 = vsub.f32 %v1290, %v1355
        %v1396 = vsub.f32 %v1294, %v1358
        %v1397 = vsub.f32 %v1296, %v1358
        %v1398 = vsub.f32 %v1298, %v1361
        %v1399 = vsub.f32 %v1300, %v1361
        %v1400 = vsub.f32 %v1304, %v1364
        %v1401 = vsub.f32 %v1306, %v1364
        %v1402 = vsub.f32 %v1308, %v1367
        %v1403 = vsub.f32 %v1310, %v1367
        %v1404 = vsub.f32 %v1314, %v1370
        %v1405 = vsub.f32 %v1316, %v1370
        %v1406 = vsub.f32 %v1318, %v1373
        %v1407 = vsub.f32 %v1320, %v1373
        %v1408 = vsub.f32 %v1324, %v1376
        %v1409 = vsub.f32 %v1326, %v1376
        %v1410 = vsub.f32 %v1328, %v1379
        %v1411 = vsub.f32 %v1330, %v1379
        %v1412 = vmul.f32 %v1380, 1.442695
        %v1413 = vpow.pop %v1412
        %v1414 = vmul.f32 %v1381, 1.442695
        %v1415 = vpow.pop %v1414
        %v1416 = vmul.f32 %v1382, 1.442695
        %v1417 = vpow.pop %v1416
        %v1418 = vmul.f32 %v1383, 1.442695
        %v1419 = vpow.pop %v1418
        %v1420 = vmul.f32 %v1384, 1.442695
        %v1421 = vpow.pop %v1420
        %v1422 = vmul.f32 %v1385, 1.442695
        %v1423 = vpow.pop %v1422
        %v1424 = vmul.f32 %v1386, 1.442695
        %v1425 = vpow.pop %v1424
        %v1426 = vmul.f32 %v1387, 1.442695
        %v1427 = vpow.pop %v1426
        %v1428 = vmul.f32 %v1388, 1.442695
        %v1429 = vpow.pop %v1428
        %v1430 = vmul.f32 %v1389, 1.442695
        %v1431 = vpow.pop %v1430
        %v1432 = vmul.f32 %v1390, 1.442695
        %v1433 = vpow.pop %v1432
        %v1434 = vmul.f32 %v1391, 1.442695
        %v1435 = vpow.pop %v1434
        %v1436 = vmul.f32 %v1392, 1.442695
        %v1437 = vpow.pop %v1436
        %v1438 = vmul.f32 %v1393, 1.442695
        %v1439 = vpow.pop %v1438
        %v1440 = vmul.f32 %v1394, 1.442695
        %v1441 = vpow.pop %v1440
        %v1442 = vmul.f32 %v1395, 1.442695
        %v1443 = vpow.pop %v1442
        %v1444 = vmul.f32 %v1396, 1.442695
        %v1445 = vpow.pop %v1444
        %v1446 = vmul.f32 %v1397, 1.442695
        %v1447 = vpow.pop %v1446
        %v1448 = vmul.f32 %v1398, 1.442695
        %v1449 = vpow.pop %v1448
        %v1450 = vmul.f32 %v1399, 1.442695
        %v1451 = vpow.pop %v1450
        %v1452 = vmul.f32 %v1400, 1.442695
        %v1453 = vpow.pop %v1452
        %v1454 = vmul.f32 %v1401, 1.442695
        %v1455 = vpow.pop %v1454
        %v1456 = vmul.f32 %v1402, 1.442695
        %v1457 = vpow.pop %v1456
        %v1458 = vmul.f32 %v1403, 1.442695
        %v1459 = vpow.pop %v1458
        %v1460 = vmul.f32 %v1404, 1.442695
        %v1461 = vpow.pop %v1460
        %v1462 = vmul.f32 %v1405, 1.442695
        %v1463 = vpow.pop %v1462
        %v1464 = vmul.f32 %v1406, 1.442695
        %v1465 = vpow.pop %v1464
        %v1466 = vmul.f32 %v1407, 1.442695
        %v1467 = vpow.pop %v1466
        %v1468 = vmul.f32 %v1408, 1.442695
        %v1469 = vpow.pop %v1468
        %v1470 = vmul.f32 %v1409, 1.442695
        %v1471 = vpow.pop %v1470
        %v1472 = vmul.f32 %v1410, 1.442695
        %v1473 = vpow.pop %v1472
        %v1474 = vmul.f32 %v1411, 1.442695
        %v1475 = vpow.pop %v1474
        %v1476 = vadd.f32 %v1413, %v1415
        %1477 = vadd.xlane.f32.xlu0 %v1476
        %v1478 = vpop.xlane.xlu0 %1477
        %v1479 = vadd.f32 %v1417, %v1419
        %1480 = vadd.xlane.f32.xlu0 %v1479
        %v1481 = vpop.xlane.xlu0 %1480
        %v1482 = vadd.f32 %v1421, %v1423
        %1483 = vadd.xlane.f32.xlu0 %v1482
        %v1484 = vpop.xlane.xlu0 %1483
        %v1485 = vadd.f32 %v1425, %v1427
        %1486 = vadd.xlane.f32.xlu0 %v1485
        %v1487 = vpop.xlane.xlu0 %1486
        %v1488 = vadd.f32 %v1429, %v1431
        %1489 = vadd.xlane.f32.xlu0 %v1488
        %v1490 = vpop.xlane.xlu0 %1489
        %v1491 = vadd.f32 %v1433, %v1435
        %1492 = vadd.xlane.f32.xlu0 %v1491
        %v1493 = vpop.xlane.xlu0 %1492
        %v1494 = vadd.f32 %v1437, %v1439
        %1495 = vadd.xlane.f32.xlu0 %v1494
        %v1496 = vpop.xlane.xlu0 %1495
        %v1497 = vadd.f32 %v1441, %v1443
        %1498 = vadd.xlane.f32.xlu0 %v1497
        %v1499 = vpop.xlane.xlu0 %1498
        %v1500 = vadd.f32 %v1445, %v1447
        %1501 = vadd.xlane.f32.xlu0 %v1500
        %v1502 = vpop.xlane.xlu0 %1501
        %v1503 = vadd.f32 %v1449, %v1451
        %1504 = vadd.xlane.f32.xlu0 %v1503
        %v1505 = vpop.xlane.xlu0 %1504
        %v1506 = vadd.f32 %v1453, %v1455
        %1507 = vadd.xlane.f32.xlu0 %v1506
        %v1508 = vpop.xlane.xlu0 %1507
        %v1509 = vadd.f32 %v1457, %v1459
        %1510 = vadd.xlane.f32.xlu0 %v1509
        %v1511 = vpop.xlane.xlu0 %1510
        %v1512 = vadd.f32 %v1461, %v1463
        %1513 = vadd.xlane.f32.xlu0 %v1512
        %v1514 = vpop.xlane.xlu0 %1513
        %v1515 = vadd.f32 %v1465, %v1467
        %1516 = vadd.xlane.f32.xlu0 %v1515
        %v1517 = vpop.xlane.xlu0 %1516
        %v1518 = vadd.f32 %v1469, %v1471
        %1519 = vadd.xlane.f32.xlu0 %v1518
        %v1520 = vpop.xlane.xlu0 %1519
        %v1521 = vadd.f32 %v1473, %v1475
        %1522 = vadd.xlane.f32.xlu0 %v1521
        %v1523 = vpop.xlane.xlu0 %1522
        %v1524 = vrcp.pop %v1478
        %v1525 = vrcp.pop %v1481
        %v1526 = vrcp.pop %v1484
        %v1527 = vrcp.pop %v1487
        %v1528 = vrcp.pop %v1490
        %v1529 = vrcp.pop %v1493
        %v1530 = vrcp.pop %v1496
        %v1531 = vrcp.pop %v1499
        %v1532 = vrcp.pop %v1502
        %v1533 = vrcp.pop %v1505
        %v1534 = vrcp.pop %v1508
        %v1535 = vrcp.pop %v1511
        %v1536 = vrcp.pop %v1514
        %v1537 = vrcp.pop %v1517
        %v1538 = vrcp.pop %v1520
        %v1539 = vrcp.pop %v1523
        %v1540 = vmul.f32 %v1413, %v1524
        %v1541 = vmul.f32 %v1415, %v1524
        %v1542 = vmul.f32 %v1417, %v1525
        %v1543 = vmul.f32 %v1419, %v1525
        %v1544 = vmul.f32 %v1421, %v1526
        %v1545 = vmul.f32 %v1423, %v1526
        %v1546 = vmul.f32 %v1425, %v1527
        %v1547 = vmul.f32 %v1427, %v1527
        %v1548 = vmul.f32 %v1429, %v1528
        %v1549 = vmul.f32 %v1431, %v1528
        %v1550 = vmul.f32 %v1433, %v1529
        %v1551 = vmul.f32 %v1435, %v1529
        %v1552 = vmul.f32 %v1437, %v1530
        %v1553 = vmul.f32 %v1439, %v1530
        %v1554 = vmul.f32 %v1441, %v1531
        %v1555 = vmul.f32 %v1443, %v1531
        %v1556 = vmul.f32 %v1445, %v1532
        %v1557 = vmul.f32 %v1447, %v1532
        %v1558 = vmul.f32 %v1449, %v1533
        %v1559 = vmul.f32 %v1451, %v1533
        %v1560 = vmul.f32 %v1453, %v1534
        %v1561 = vmul.f32 %v1455, %v1534
        %v1562 = vmul.f32 %v1457, %v1535
        %v1563 = vmul.f32 %v1459, %v1535
        %v1564 = vmul.f32 %v1461, %v1536
        %v1565 = vmul.f32 %v1463, %v1536
        %v1566 = vmul.f32 %v1465, %v1537
        %v1567 = vmul.f32 %v1467, %v1537
        %v1568 = vmul.f32 %v1469, %v1538
        %v1569 = vmul.f32 %v1471, %v1538
        %v1570 = vmul.f32 %v1473, %v1539
        %v1571 = vmul.f32 %v1475, %v1539
        %v1572 = vpack.c.bf16 %v1542, %v1540
        %v1573 = vpack.c.bf16 %v1543, %v1541
        %v1574 = vpack.c.bf16 %v1546, %v1544
        %v1575 = vpack.c.bf16 %v1547, %v1545
        %v1576 = vpack.c.bf16 %v1550, %v1548
        %v1577 = vpack.c.bf16 %v1551, %v1549
        %v1578 = vpack.c.bf16 %v1554, %v1552
        %v1579 = vpack.c.bf16 %v1555, %v1553
        %v1580 = vpack.c.bf16 %v1558, %v1556
        %v1581 = vpack.c.bf16 %v1559, %v1557
        %v1582 = vpack.c.bf16 %v1562, %v1560
        %v1583 = vpack.c.bf16 %v1563, %v1561
        %v1584 = vpack.c.bf16 %v1566, %v1564
        %v1585 = vpack.c.bf16 %v1567, %v1565
        %v1586 = vpack.c.bf16 %v1570, %v1568
        %v1587 = vpack.c.bf16 %v1571, %v1569
        %v1590 = vunpack.c.l.b16 %v1160
        %v1591 = vunpack.c.h.b16 %v1160
        %v1592 = vunpack.c.l.b16 %v1161
        %v1593 = vunpack.c.h.b16 %v1161
        %v1594 = vpack.c.b16 %v1592, %v1590
        %v1595 = vpack.c.b16 %v1593, %v1591
        %1598 = vmatprep.subr.bf16.mxu0 %v1587
        %1599 = vmatpush1.bf16.xpose.msra.mxu0 %v1586
        %1600 = vmatprep.subr.bf16.mxu0 %v1585
        %1601 = vmatpush1.bf16.xpose.msra.mxu0 %v1584
        %1602 = vmatprep.subr.bf16.mxu0 %v1583
        %1603 = vmatpush1.bf16.xpose.msra.mxu0 %v1582
        %1604 = vmatprep.subr.bf16.mxu0 %v1581
        %1605 = vmatpush1.bf16.xpose.msra.mxu0 %v1580
        %1606 = vmatprep.subr.bf16.mxu0 %v1579
        %1607 = vmatpush1.bf16.xpose.msra.mxu0 %v1578
        %1608 = vmatprep.subr.bf16.mxu0 %v1577
        %1609 = vmatpush1.bf16.xpose.msra.mxu0 %v1576
        %1610 = vmatprep.subr.bf16.mxu0 %v1575
        %1611 = vmatpush1.bf16.xpose.msra.mxu0 %v1574
        %1612 = vmatprep.subr.bf16.mxu0 %v1573
        %1613 = vmatpush1.bf16.xpose.msra.mxu0 %v1572
        %1614 = vmatprep.subr.bf16.mxu0 0
        %1615 = vmatpush2.bf16.xpose.msra.mxu0 0
        %1616 = vmatprep.subr.bf16.mxu0 0
        %1617 = vmatpush2.bf16.xpose.msra.mxu0 0
        %1618 = vmatprep.subr.bf16.mxu0 0
        %1619 = vmatpush2.bf16.xpose.msra.mxu0 0
        %1620 = vmatprep.subr.bf16.mxu0 0
        %1621 = vmatpush2.bf16.xpose.msra.mxu0 0
        %1622 = vmatprep.subr.bf16.mxu0 0
        %1623 = vmatpush2.bf16.xpose.msra.mxu0 0
        %1624 = vmatprep.subr.bf16.mxu0 0
        %1625 = vmatpush2.bf16.xpose.msra.mxu0 0
        %1626 = vmatprep.subr.bf16.mxu0 0
        %1627 = vmatpush2.bf16.xpose.msra.mxu0 0
        %1628 = vmatprep.subr.bf16.mxu0 0
        %1629 = vmatpush2.bf16.xpose.msra.mxu0 0
        %1630 = vmatprep.mubr.bf16.mxu0 %v1595
        %1631 = vmatmul.mubr.bf16.gmra.mxu0 %v1594
        %v1632 = vpop.f32.mrf.mxu0
        %v1633 = vadd.f32 0.0, %v1632
        %v1634 = vpop.f32.mrf.mxu0
        %v1635 = vpop.f32.mrf.mxu0
        %v1636 = vadd.f32 0.0, %v1635
        %v1637 = vpop.f32.mrf.mxu0
        %1638 = vdwg.mxu0
        %1639 = vst [vmem:[#allocation5] sm:$0xff] %v1633
        %1640 = vst [vmem:[#allocation5 + $0x8] sm:$0xff] %v1636
        %v1641 = vld [vmem:[#allocation3 + $0x10] sm:$0xff]
        %v1642 = vld [vmem:[#allocation3 + $0x18] sm:$0xff]
        %v1643 = vld [vmem:[#allocation4 + $0x10] sm:$0xff]
        %v1644 = vld [vmem:[#allocation4 + $0x18] sm:$0xff]
        %v1647 = vunpack.c.l.b16 %v1156
        %v1648 = vunpack.c.l.b16 %v1157
        %v1649 = vpack.c.b16 %v1648, %v1647
        %1651 = vxpose.xlu0.c.b16.start [1/8] %v1649, 128
        %1652 = vxpose.xlu0.c.b16.cont [2/8] 0, 128
        %1653 = vxpose.xlu0.c.b16.cont [3/8] 0, 128
        %1654 = vxpose.xlu0.c.b16.cont [4/8] 0, 128
        %1655 = vxpose.xlu0.c.b16.cont [5/8] 0, 128
        %1656 = vxpose.xlu0.c.b16.cont [6/8] 0, 128
        %1657 = vxpose.xlu0.c.b16.cont [7/8] 0, 128
        %1658 = vxpose.xlu0.c.b16.end [8/8] 0, 128
        %v1659 = vpop.trf.xlu0
        %v1660 = vpop.trf.xlu0
        %v1661 = vpop.trf.xlu0
        %v1662 = vpop.trf.xlu0
        %v1663 = vpop.trf.xlu0
        %v1664 = vpop.trf.xlu0
        %v1665 = vpop.trf.xlu0
        %v1666 = vpop.trf.xlu0
        %v1669 = vunpack.c.l.b16 %v1641
        %v1670 = vunpack.c.h.b16 %v1641
        %v1671 = vunpack.c.l.b16 %v1642
        %v1672 = vunpack.c.h.b16 %v1642
        %v1673 = vpack.c.b16 %v1671, %v1669
        %v1674 = vpack.c.b16 %v1672, %v1670
        %v1678 = vsel %vm1194, %v1659, 0
        %v1681 = vsel %vm1194, %v1660, 0
        %v1684 = vsel %vm1194, %v1661, 0
        %v1687 = vsel %vm1194, %v1662, 0
        %v1690 = vsel %vm1194, %v1663, 0
        %v1693 = vsel %vm1194, %v1664, 0
        %v1696 = vsel %vm1194, %v1665, 0
        %v1699 = vsel %vm1194, %v1666, 0
        %1701 = vmatprep.subr.bf16.mxu0 0
        %1702 = vmatpush1.bf16.msra.mxu0 0
        %1703 = vmatprep.subr.bf16.mxu0 0
        %1704 = vmatpush1.bf16.msra.mxu0 0
        %1705 = vmatprep.subr.bf16.mxu0 0
        %1706 = vmatpush1.bf16.msra.mxu0 0
        %1707 = vmatprep.subr.bf16.mxu0 0
        %1708 = vmatpush1.bf16.msra.mxu0 0
        %1709 = vmatprep.subr.bf16.mxu0 0
        %1710 = vmatpush1.bf16.msra.mxu0 0
        %1711 = vmatprep.subr.bf16.mxu0 0
        %1712 = vmatpush1.bf16.msra.mxu0 0
        %1713 = vmatprep.subr.bf16.mxu0 0
        %1714 = vmatpush1.bf16.msra.mxu0 0
        %1715 = vmatprep.subr.bf16.mxu0 %v1674
        %1716 = vmatpush1.bf16.msra.mxu0 %v1673
        %1717 = vmatprep.subr.bf16.mxu0 0
        %1718 = vmatpush2.bf16.msra.mxu0 0
        %1719 = vmatprep.subr.bf16.mxu0 0
        %1720 = vmatpush2.bf16.msra.mxu0 0
        %1721 = vmatprep.subr.bf16.mxu0 0
        %1722 = vmatpush2.bf16.msra.mxu0 0
        %1723 = vmatprep.subr.bf16.mxu0 0
        %1724 = vmatpush2.bf16.msra.mxu0 0
        %1725 = vmatprep.subr.bf16.mxu0 0
        %1726 = vmatpush2.bf16.msra.mxu0 0
        %1727 = vmatprep.subr.bf16.mxu0 0
        %1728 = vmatpush2.bf16.msra.mxu0 0
        %1729 = vmatprep.subr.bf16.mxu0 0
        %1730 = vmatpush2.bf16.msra.mxu0 0
        %1731 = vmatprep.subr.bf16.mxu0 0
        %1732 = vmatpush2.bf16.msra.mxu0 0
        %1733 = vmatprep.mubr.bf16.mxu0 0
        %1734 = vmatmul.mubr.bf16.gmra.mxu0 %v1678
        %v1735 = vpop.f32.mrf.mxu0
        %v1736 = vadd.f32 0.0, %v1735
        %v1737 = vpop.f32.mrf.mxu0
        %v1738 = vadd.f32 0.0, %v1737
        %v1739 = vpop.f32.mrf.mxu0
        %v1740 = vadd.f32 0.0, %v1739
        %v1741 = vpop.f32.mrf.mxu0
        %v1742 = vadd.f32 0.0, %v1741
        %1743 = vmatprep.mubr.bf16.mxu0 0
        %1744 = vmatmul.mubr.bf16.gmra.mxu0 %v1681
        %v1745 = vpop.f32.mrf.mxu0
        %v1746 = vadd.f32 0.0, %v1745
        %v1747 = vpop.f32.mrf.mxu0
        %v1748 = vadd.f32 0.0, %v1747
        %v1749 = vpop.f32.mrf.mxu0
        %v1750 = vadd.f32 0.0, %v1749
        %v1751 = vpop.f32.mrf.mxu0
        %v1752 = vadd.f32 0.0, %v1751
        %1753 = vmatprep.mubr.bf16.mxu0 0
        %1754 = vmatmul.mubr.bf16.gmra.mxu0 %v1684
        %v1755 = vpop.f32.mrf.mxu0
        %v1756 = vadd.f32 0.0, %v1755
        %v1757 = vpop.f32.mrf.mxu0
        %v1758 = vadd.f32 0.0, %v1757
        %v1759 = vpop.f32.mrf.mxu0
        %v1760 = vadd.f32 0.0, %v1759
        %v1761 = vpop.f32.mrf.mxu0
        %v1762 = vadd.f32 0.0, %v1761
        %1763 = vmatprep.mubr.bf16.mxu0 0
        %1764 = vmatmul.mubr.bf16.gmra.mxu0 %v1687
        %v1765 = vpop.f32.mrf.mxu0
        %v1766 = vadd.f32 0.0, %v1765
        %v1767 = vpop.f32.mrf.mxu0
        %v1768 = vadd.f32 0.0, %v1767
        %v1769 = vpop.f32.mrf.mxu0
        %v1770 = vadd.f32 0.0, %v1769
        %v1771 = vpop.f32.mrf.mxu0
        %v1772 = vadd.f32 0.0, %v1771
        %1773 = vmatprep.mubr.bf16.mxu0 0
        %1774 = vmatmul.mubr.bf16.gmra.mxu0 %v1690
        %v1775 = vpop.f32.mrf.mxu0
        %v1776 = vadd.f32 0.0, %v1775
        %v1777 = vpop.f32.mrf.mxu0
        %v1778 = vadd.f32 0.0, %v1777
        %v1779 = vpop.f32.mrf.mxu0
        %v1780 = vadd.f32 0.0, %v1779
        %v1781 = vpop.f32.mrf.mxu0
        %v1782 = vadd.f32 0.0, %v1781
        %1783 = vmatprep.mubr.bf16.mxu0 0
        %1784 = vmatmul.mubr.bf16.gmra.mxu0 %v1693
        %v1785 = vpop.f32.mrf.mxu0
        %v1786 = vadd.f32 0.0, %v1785
        %v1787 = vpop.f32.mrf.mxu0
        %v1788 = vadd.f32 0.0, %v1787
        %v1789 = vpop.f32.mrf.mxu0
        %v1790 = vadd.f32 0.0, %v1789
        %v1791 = vpop.f32.mrf.mxu0
        %v1792 = vadd.f32 0.0, %v1791
        %1793 = vmatprep.mubr.bf16.mxu0 0
        %1794 = vmatmul.mubr.bf16.gmra.mxu0 %v1696
        %v1795 = vpop.f32.mrf.mxu0
        %v1796 = vadd.f32 0.0, %v1795
        %v1797 = vpop.f32.mrf.mxu0
        %v1798 = vadd.f32 0.0, %v1797
        %v1799 = vpop.f32.mrf.mxu0
        %v1800 = vadd.f32 0.0, %v1799
        %v1801 = vpop.f32.mrf.mxu0
        %v1802 = vadd.f32 0.0, %v1801
        %1803 = vmatprep.mubr.bf16.mxu0 0
        %1804 = vmatmul.mubr.bf16.gmra.mxu0 %v1699
        %v1805 = vpop.f32.mrf.mxu0
        %v1806 = vadd.f32 0.0, %v1805
        %v1807 = vpop.f32.mrf.mxu0
        %v1808 = vadd.f32 0.0, %v1807
        %v1809 = vpop.f32.mrf.mxu0
        %v1810 = vadd.f32 0.0, %v1809
        %v1811 = vpop.f32.mrf.mxu0
        %v1812 = vadd.f32 0.0, %v1811
        %1813 = vdwg.mxu0
        %v1814 = vmax.f32 %v1736, %v1738
        %1815 = vmax.xlane.f32.xlu0 %v1814
        %v1816 = vpop.xlane.xlu0 %1815
        %v1817 = vmax.f32 %v1740, %v1742
        %1818 = vmax.xlane.f32.xlu0 %v1817
        %v1819 = vpop.xlane.xlu0 %1818
        %v1820 = vmax.f32 %v1746, %v1748
        %1821 = vmax.xlane.f32.xlu0 %v1820
        %v1822 = vpop.xlane.xlu0 %1821
        %v1823 = vmax.f32 %v1750, %v1752
        %1824 = vmax.xlane.f32.xlu0 %v1823
        %v1825 = vpop.xlane.xlu0 %1824
        %v1826 = vmax.f32 %v1756, %v1758
        %1827 = vmax.xlane.f32.xlu0 %v1826
        %v1828 = vpop.xlane.xlu0 %1827
        %v1829 = vmax.f32 %v1760, %v1762
        %1830 = vmax.xlane.f32.xlu0 %v1829
        %v1831 = vpop.xlane.xlu0 %1830
        %v1832 = vmax.f32 %v1766, %v1768
        %1833 = vmax.xlane.f32.xlu0 %v1832
        %v1834 = vpop.xlane.xlu0 %1833
        %v1835 = vmax.f32 %v1770, %v1772
        %1836 = vmax.xlane.f32.xlu0 %v1835
        %v1837 = vpop.xlane.xlu0 %1836
        %v1838 = vmax.f32 %v1776, %v1778
        %1839 = vmax.xlane.f32.xlu0 %v1838
        %v1840 = vpop.xlane.xlu0 %1839
        %v1841 = vmax.f32 %v1780, %v1782
        %1842 = vmax.xlane.f32.xlu0 %v1841
        %v1843 = vpop.xlane.xlu0 %1842
        %v1844 = vmax.f32 %v1786, %v1788
        %1845 = vmax.xlane.f32.xlu0 %v1844
        %v1846 = vpop.xlane.xlu0 %1845
        %v1847 = vmax.f32 %v1790, %v1792
        %1848 = vmax.xlane.f32.xlu0 %v1847
        %v1849 = vpop.xlane.xlu0 %1848
        %v1850 = vmax.f32 %v1796, %v1798
        %1851 = vmax.xlane.f32.xlu0 %v1850
        %v1852 = vpop.xlane.xlu0 %1851
        %v1853 = vmax.f32 %v1800, %v1802
        %1854 = vmax.xlane.f32.xlu0 %v1853
        %v1855 = vpop.xlane.xlu0 %1854
        %v1856 = vmax.f32 %v1806, %v1808
        %1857 = vmax.xlane.f32.xlu0 %v1856
        %v1858 = vpop.xlane.xlu0 %1857
        %v1859 = vmax.f32 %v1810, %v1812
        %1860 = vmax.xlane.f32.xlu0 %v1859
        %v1861 = vpop.xlane.xlu0 %1860
        %v1862 = vsub.f32 %v1736, %v1816
        %v1863 = vsub.f32 %v1738, %v1816
        %v1864 = vsub.f32 %v1740, %v1819
        %v1865 = vsub.f32 %v1742, %v1819
        %v1866 = vsub.f32 %v1746, %v1822
        %v1867 = vsub.f32 %v1748, %v1822
        %v1868 = vsub.f32 %v1750, %v1825
        %v1869 = vsub.f32 %v1752, %v1825
        %v1870 = vsub.f32 %v1756, %v1828
        %v1871 = vsub.f32 %v1758, %v1828
        %v1872 = vsub.f32 %v1760, %v1831
        %v1873 = vsub.f32 %v1762, %v1831
        %v1874 = vsub.f32 %v1766, %v1834
        %v1875 = vsub.f32 %v1768, %v1834
        %v1876 = vsub.f32 %v1770, %v1837
        %v1877 = vsub.f32 %v1772, %v1837
        %v1878 = vsub.f32 %v1776, %v1840
        %v1879 = vsub.f32 %v1778, %v1840
        %v1880 = vsub.f32 %v1780, %v1843
        %v1881 = vsub.f32 %v1782, %v1843
        %v1882 = vsub.f32 %v1786, %v1846
        %v1883 = vsub.f32 %v1788, %v1846
        %v1884 = vsub.f32 %v1790, %v1849
        %v1885 = vsub.f32 %v1792, %v1849
        %v1886 = vsub.f32 %v1796, %v1852
        %v1887 = vsub.f32 %v1798, %v1852
        %v1888 = vsub.f32 %v1800, %v1855
        %v1889 = vsub.f32 %v1802, %v1855
        %v1890 = vsub.f32 %v1806, %v1858
        %v1891 = vsub.f32 %v1808, %v1858
        %v1892 = vsub.f32 %v1810, %v1861
        %v1893 = vsub.f32 %v1812, %v1861
        %v1894 = vmul.f32 %v1862, 1.442695
        %v1895 = vpow.pop %v1894
        %v1896 = vmul.f32 %v1863, 1.442695
        %v1897 = vpow.pop %v1896
        %v1898 = vmul.f32 %v1864, 1.442695
        %v1899 = vpow.pop %v1898
        %v1900 = vmul.f32 %v1865, 1.442695
        %v1901 = vpow.pop %v1900
        %v1902 = vmul.f32 %v1866, 1.442695
        %v1903 = vpow.pop %v1902
        %v1904 = vmul.f32 %v1867, 1.442695
        %v1905 = vpow.pop %v1904
        %v1906 = vmul.f32 %v1868, 1.442695
        %v1907 = vpow.pop %v1906
        %v1908 = vmul.f32 %v1869, 1.442695
        %v1909 = vpow.pop %v1908
        %v1910 = vmul.f32 %v1870, 1.442695
        %v1911 = vpow.pop %v1910
        %v1912 = vmul.f32 %v1871, 1.442695
        %v1913 = vpow.pop %v1912
        %v1914 = vmul.f32 %v1872, 1.442695
        %v1915 = vpow.pop %v1914
        %v1916 = vmul.f32 %v1873, 1.442695
        %v1917 = vpow.pop %v1916
        %v1918 = vmul.f32 %v1874, 1.442695
        %v1919 = vpow.pop %v1918
        %v1920 = vmul.f32 %v1875, 1.442695
        %v1921 = vpow.pop %v1920
        %v1922 = vmul.f32 %v1876, 1.442695
        %v1923 = vpow.pop %v1922
        %v1924 = vmul.f32 %v1877, 1.442695
        %v1925 = vpow.pop %v1924
        %v1926 = vmul.f32 %v1878, 1.442695
        %v1927 = vpow.pop %v1926
        %v1928 = vmul.f32 %v1879, 1.442695
        %v1929 = vpow.pop %v1928
        %v1930 = vmul.f32 %v1880, 1.442695
        %v1931 = vpow.pop %v1930
        %v1932 = vmul.f32 %v1881, 1.442695
        %v1933 = vpow.pop %v1932
        %v1934 = vmul.f32 %v1882, 1.442695
        %v1935 = vpow.pop %v1934
        %v1936 = vmul.f32 %v1883, 1.442695
        %v1937 = vpow.pop %v1936
        %v1938 = vmul.f32 %v1884, 1.442695
        %v1939 = vpow.pop %v1938
        %v1940 = vmul.f32 %v1885, 1.442695
        %v1941 = vpow.pop %v1940
        %v1942 = vmul.f32 %v1886, 1.442695
        %v1943 = vpow.pop %v1942
        %v1944 = vmul.f32 %v1887, 1.442695
        %v1945 = vpow.pop %v1944
        %v1946 = vmul.f32 %v1888, 1.442695
        %v1947 = vpow.pop %v1946
        %v1948 = vmul.f32 %v1889, 1.442695
        %v1949 = vpow.pop %v1948
        %v1950 = vmul.f32 %v1890, 1.442695
        %v1951 = vpow.pop %v1950
        %v1952 = vmul.f32 %v1891, 1.442695
        %v1953 = vpow.pop %v1952
        %v1954 = vmul.f32 %v1892, 1.442695
        %v1955 = vpow.pop %v1954
        %v1956 = vmul.f32 %v1893, 1.442695
        %v1957 = vpow.pop %v1956
        %v1958 = vadd.f32 %v1895, %v1897
        %1959 = vadd.xlane.f32.xlu0 %v1958
        %v1960 = vpop.xlane.xlu0 %1959
        %v1961 = vadd.f32 %v1899, %v1901
        %1962 = vadd.xlane.f32.xlu0 %v1961
        %v1963 = vpop.xlane.xlu0 %1962
        %v1964 = vadd.f32 %v1903, %v1905
        %1965 = vadd.xlane.f32.xlu0 %v1964
        %v1966 = vpop.xlane.xlu0 %1965
        %v1967 = vadd.f32 %v1907, %v1909
        %1968 = vadd.xlane.f32.xlu0 %v1967
        %v1969 = vpop.xlane.xlu0 %1968
        %v1970 = vadd.f32 %v1911, %v1913
        %1971 = vadd.xlane.f32.xlu0 %v1970
        %v1972 = vpop.xlane.xlu0 %1971
        %v1973 = vadd.f32 %v1915, %v1917
        %1974 = vadd.xlane.f32.xlu0 %v1973
        %v1975 = vpop.xlane.xlu0 %1974
        %v1976 = vadd.f32 %v1919, %v1921
        %1977 = vadd.xlane.f32.xlu0 %v1976
        %v1978 = vpop.xlane.xlu0 %1977
        %v1979 = vadd.f32 %v1923, %v1925
        %1980 = vadd.xlane.f32.xlu0 %v1979
        %v1981 = vpop.xlane.xlu0 %1980
        %v1982 = vadd.f32 %v1927, %v1929
        %1983 = vadd.xlane.f32.xlu0 %v1982
        %v1984 = vpop.xlane.xlu0 %1983
        %v1985 = vadd.f32 %v1931, %v1933
        %1986 = vadd.xlane.f32.xlu0 %v1985
        %v1987 = vpop.xlane.xlu0 %1986
        %v1988 = vadd.f32 %v1935, %v1937
        %1989 = vadd.xlane.f32.xlu0 %v1988
        %v1990 = vpop.xlane.xlu0 %1989
        %v1991 = vadd.f32 %v1939, %v1941
        %1992 = vadd.xlane.f32.xlu0 %v1991
        %v1993 = vpop.xlane.xlu0 %1992
        %v1994 = vadd.f32 %v1943, %v1945
        %1995 = vadd.xlane.f32.xlu0 %v1994
        %v1996 = vpop.xlane.xlu0 %1995
        %v1997 = vadd.f32 %v1947, %v1949
        %1998 = vadd.xlane.f32.xlu0 %v1997
        %v1999 = vpop.xlane.xlu0 %1998
        %v2000 = vadd.f32 %v1951, %v1953
        %2001 = vadd.xlane.f32.xlu0 %v2000
        %v2002 = vpop.xlane.xlu0 %2001
        %v2003 = vadd.f32 %v1955, %v1957
        %2004 = vadd.xlane.f32.xlu0 %v2003
        %v2005 = vpop.xlane.xlu0 %2004
        %v2006 = vrcp.pop %v1960
        %v2007 = vrcp.pop %v1963
        %v2008 = vrcp.pop %v1966
        %v2009 = vrcp.pop %v1969
        %v2010 = vrcp.pop %v1972
        %v2011 = vrcp.pop %v1975
        %v2012 = vrcp.pop %v1978
        %v2013 = vrcp.pop %v1981
        %v2014 = vrcp.pop %v1984
        %v2015 = vrcp.pop %v1987
        %v2016 = vrcp.pop %v1990
        %v2017 = vrcp.pop %v1993
        %v2018 = vrcp.pop %v1996
        %v2019 = vrcp.pop %v1999
        %v2020 = vrcp.pop %v2002
        %v2021 = vrcp.pop %v2005
        %v2022 = vmul.f32 %v1895, %v2006
        %v2023 = vmul.f32 %v1897, %v2006
        %v2024 = vmul.f32 %v1899, %v2007
        %v2025 = vmul.f32 %v1901, %v2007
        %v2026 = vmul.f32 %v1903, %v2008
        %v2027 = vmul.f32 %v1905, %v2008
        %v2028 = vmul.f32 %v1907, %v2009
        %v2029 = vmul.f32 %v1909, %v2009
        %v2030 = vmul.f32 %v1911, %v2010
        %v2031 = vmul.f32 %v1913, %v2010
        %v2032 = vmul.f32 %v1915, %v2011
        %v2033 = vmul.f32 %v1917, %v2011
        %v2034 = vmul.f32 %v1919, %v2012
        %v2035 = vmul.f32 %v1921, %v2012
        %v2036 = vmul.f32 %v1923, %v2013
        %v2037 = vmul.f32 %v1925, %v2013
        %v2038 = vmul.f32 %v1927, %v2014
        %v2039 = vmul.f32 %v1929, %v2014
        %v2040 = vmul.f32 %v1931, %v2015
        %v2041 = vmul.f32 %v1933, %v2015
        %v2042 = vmul.f32 %v1935, %v2016
        %v2043 = vmul.f32 %v1937, %v2016
        %v2044 = vmul.f32 %v1939, %v2017
        %v2045 = vmul.f32 %v1941, %v2017
        %v2046 = vmul.f32 %v1943, %v2018
        %v2047 = vmul.f32 %v1945, %v2018
        %v2048 = vmul.f32 %v1947, %v2019
        %v2049 = vmul.f32 %v1949, %v2019
        %v2050 = vmul.f32 %v1951, %v2020
        %v2051 = vmul.f32 %v1953, %v2020
        %v2052 = vmul.f32 %v1955, %v2021
        %v2053 = vmul.f32 %v1957, %v2021
        %v2054 = vpack.c.bf16 %v2024, %v2022
        %v2055 = vpack.c.bf16 %v2025, %v2023
        %v2056 = vpack.c.bf16 %v2028, %v2026
        %v2057 = vpack.c.bf16 %v2029, %v2027
        %v2058 = vpack.c.bf16 %v2032, %v2030
        %v2059 = vpack.c.bf16 %v2033, %v2031
        %v2060 = vpack.c.bf16 %v2036, %v2034
        %v2061 = vpack.c.bf16 %v2037, %v2035
        %v2062 = vpack.c.bf16 %v2040, %v2038
        %v2063 = vpack.c.bf16 %v2041, %v2039
        %v2064 = vpack.c.bf16 %v2044, %v2042
        %v2065 = vpack.c.bf16 %v2045, %v2043
        %v2066 = vpack.c.bf16 %v2048, %v2046
        %v2067 = vpack.c.bf16 %v2049, %v2047
        %v2068 = vpack.c.bf16 %v2052, %v2050
        %v2069 = vpack.c.bf16 %v2053, %v2051
        %v2072 = vunpack.c.l.b16 %v1643
        %v2073 = vunpack.c.h.b16 %v1643
        %v2074 = vunpack.c.l.b16 %v1644
        %v2075 = vunpack.c.h.b16 %v1644
        %v2076 = vpack.c.b16 %v2074, %v2072
        %v2077 = vpack.c.b16 %v2075, %v2073
        %2080 = vmatprep.subr.bf16.mxu0 %v2069
        %2081 = vmatpush1.bf16.xpose.msra.mxu0 %v2068
        %2082 = vmatprep.subr.bf16.mxu0 %v2067
        %2083 = vmatpush1.bf16.xpose.msra.mxu0 %v2066
        %2084 = vmatprep.subr.bf16.mxu0 %v2065
        %2085 = vmatpush1.bf16.xpose.msra.mxu0 %v2064
        %2086 = vmatprep.subr.bf16.mxu0 %v2063
        %2087 = vmatpush1.bf16.xpose.msra.mxu0 %v2062
        %2088 = vmatprep.subr.bf16.mxu0 %v2061
        %2089 = vmatpush1.bf16.xpose.msra.mxu0 %v2060
        %2090 = vmatprep.subr.bf16.mxu0 %v2059
        %2091 = vmatpush1.bf16.xpose.msra.mxu0 %v2058
        %2092 = vmatprep.subr.bf16.mxu0 %v2057
        %2093 = vmatpush1.bf16.xpose.msra.mxu0 %v2056
        %2094 = vmatprep.subr.bf16.mxu0 %v2055
        %2095 = vmatpush1.bf16.xpose.msra.mxu0 %v2054
        %2096 = vmatprep.subr.bf16.mxu0 0
        %2097 = vmatpush2.bf16.xpose.msra.mxu0 0
        %2098 = vmatprep.subr.bf16.mxu0 0
        %2099 = vmatpush2.bf16.xpose.msra.mxu0 0
        %2100 = vmatprep.subr.bf16.mxu0 0
        %2101 = vmatpush2.bf16.xpose.msra.mxu0 0
        %2102 = vmatprep.subr.bf16.mxu0 0
        %2103 = vmatpush2.bf16.xpose.msra.mxu0 0
        %2104 = vmatprep.subr.bf16.mxu0 0
        %2105 = vmatpush2.bf16.xpose.msra.mxu0 0
        %2106 = vmatprep.subr.bf16.mxu0 0
        %2107 = vmatpush2.bf16.xpose.msra.mxu0 0
        %2108 = vmatprep.subr.bf16.mxu0 0
        %2109 = vmatpush2.bf16.xpose.msra.mxu0 0
        %2110 = vmatprep.subr.bf16.mxu0 0
        %2111 = vmatpush2.bf16.xpose.msra.mxu0 0
        %2112 = vmatprep.mubr.bf16.mxu0 %v2077
        %2113 = vmatmul.mubr.bf16.gmra.mxu0 %v2076
        %v2114 = vpop.f32.mrf.mxu0
        %v2115 = vadd.f32 0.0, %v2114
        %v2116 = vpop.f32.mrf.mxu0
        %v2117 = vpop.f32.mrf.mxu0
        %v2118 = vadd.f32 0.0, %v2117
        %v2119 = vpop.f32.mrf.mxu0
        %2120 = vdwg.mxu0
        %2121 = vst [vmem:[#allocation5 + $0x10] sm:$0xff] %v2115
        %2122 = vst [vmem:[#allocation5 + $0x18] sm:$0xff] %v2118
        %v2123 = vld [vmem:[#allocation11] sm:$0xff]
        %v2124 = vld [vmem:[#allocation11 + $0x8] sm:$0xff]
        %v2125 = vld [vmem:[#allocation11 + $0x10] sm:$0xff]
        %v2126 = vld [vmem:[#allocation11 + $0x18] sm:$0xff]
        %v2127 = vld [vmem:[#allocation5] sm:$0xff]
        %v2128 = vld [vmem:[#allocation5 + $0x8] sm:$0xff]
        %v2129 = vld [vmem:[#allocation5 + $0x10] sm:$0xff]
        %v2130 = vld [vmem:[#allocation5 + $0x18] sm:$0xff]
        %v2131 = vld [vmem:[%s8] sm:$0xff]
        %v2132 = vld [vmem:[%s8 + $0x8] sm:$0xff]
        %v2133 = vld [vmem:[%s8 + $0x10] sm:$0xff]
        %v2134 = vld [vmem:[%s8 + $0x18] sm:$0xff]
        %2136 = vset.pattern.permute.xlu0 0
        %2137 = vperm.xlu0 %2136, %v2131
        %v2138 = vpop.permute.xlu0 %2137
        %2141 = vset.pattern.permute.xlu0 0
        %2142 = vperm.xlu0 %2141, %v2132
        %v2143 = vpop.permute.xlu0 %2142
        %2146 = vset.pattern.permute.xlu0 0
        %2147 = vperm.xlu0 %2146, %v2133
        %v2148 = vpop.permute.xlu0 %2147
        %2151 = vset.pattern.permute.xlu0 0
        %2152 = vperm.xlu0 %2151, %v2134
        %v2153 = vpop.permute.xlu0 %2152
        %vm2155 = vcmask 261120
        %v2157 = vsel %vm2155, %v2123, 0
        %v2160 = vsel %vm2155, %v2124, 0
        %v2163 = vsel %vm2155, %v2125, 0
        %v2166 = vsel %vm2155, %v2126, 0
        %2168 = vmatprep.subr.mxu0 0.0
        %2169 = vmatpush1.msra.mxu0 0.0
        %2170 = vmatprep.subr.mxu0 0.0
        %2171 = vmatpush1.msra.mxu0 0.0
        %2172 = vmatprep.subr.mxu0 0.0
        %2173 = vmatpush1.msra.mxu0 0.0
        %2174 = vmatprep.subr.mxu0 0.0
        %2175 = vmatpush1.msra.mxu0 0.0
        %2176 = vmatprep.subr.mxu0 0.0
        %2177 = vmatpush1.msra.mxu0 0.0
        %2178 = vmatprep.subr.mxu0 0.0
        %2179 = vmatpush1.msra.mxu0 0.0
        %2180 = vmatprep.subr.mxu0 0.0
        %2181 = vmatpush1.msra.mxu0 0.0
        %2182 = vmatprep.subr.mxu0 0.0
        %2183 = vmatpush1.msra.mxu0 0.0
        %2184 = vmatprep.subr.mxu0 0.0
        %2185 = vmatpush1.msra.mxu0 0.0
        %2186 = vmatprep.subr.mxu0 0.0
        %2187 = vmatpush1.msra.mxu0 0.0
        %2188 = vmatprep.subr.mxu0 0.0
        %2189 = vmatpush1.msra.mxu0 0.0
        %2190 = vmatprep.subr.mxu0 0.0
        %2191 = vmatpush1.msra.mxu0 0.0
        %2192 = vmatprep.subr.mxu0 0.0
        %2193 = vmatpush1.msra.mxu0 %v2130
        %2194 = vmatprep.subr.mxu0 0.0
        %2195 = vmatpush1.msra.mxu0 %v2129
        %2196 = vmatprep.subr.mxu0 0.0
        %2197 = vmatpush1.msra.mxu0 %v2128
        %2198 = vmatprep.subr.mxu0 0.0
        %2199 = vmatpush1.msra.mxu0 %v2127
        %2200 = vmatprep.subr.mxu0 0.0
        %2201 = vmatpush2.msra.mxu0 0.0
        %2202 = vmatprep.subr.mxu0 0.0
        %2203 = vmatpush2.msra.mxu0 0.0
        %2204 = vmatprep.subr.mxu0 0.0
        %2205 = vmatpush2.msra.mxu0 0.0
        %2206 = vmatprep.subr.mxu0 0.0
        %2207 = vmatpush2.msra.mxu0 0.0
        %2208 = vmatprep.subr.mxu0 0.0
        %2209 = vmatpush2.msra.mxu0 0.0
        %2210 = vmatprep.subr.mxu0 0.0
        %2211 = vmatpush2.msra.mxu0 0.0
        %2212 = vmatprep.subr.mxu0 0.0
        %2213 = vmatpush2.msra.mxu0 0.0
        %2214 = vmatprep.subr.mxu0 0.0
        %2215 = vmatpush2.msra.mxu0 0.0
        %2216 = vmatprep.subr.mxu0 0.0
        %2217 = vmatpush2.msra.mxu0 0.0
        %2218 = vmatprep.subr.mxu0 0.0
        %2219 = vmatpush2.msra.mxu0 0.0
        %2220 = vmatprep.subr.mxu0 0.0
        %2221 = vmatpush2.msra.mxu0 0.0
        %2222 = vmatprep.subr.mxu0 0.0
        %2223 = vmatpush2.msra.mxu0 0.0
        %2224 = vmatprep.subr.mxu0 0.0
        %2225 = vmatpush2.msra.mxu0 0.0
        %2226 = vmatprep.subr.mxu0 0.0
        %2227 = vmatpush2.msra.mxu0 0.0
        %2228 = vmatprep.subr.mxu0 0.0
        %2229 = vmatpush2.msra.mxu0 0.0
        %2230 = vmatprep.subr.mxu0 0.0
        %2231 = vmatpush2.msra.mxu0 0.0
        %2232 = vmatprep.mubr.f32.mxu0 0.0
        %2233 = vmatmul.mubr.f32.gmra.mxu0 %v2157
        %v2234 = vpop.f32.mrf.mxu0
        %v2235 = vadd.f32 %v2138, %v2234
        %v2236 = vpop.f32.mrf.mxu0
        %2237 = vmatprep.mubr.f32.mxu0 0.0
        %2238 = vmatmul.mubr.f32.gmra.mxu0 %v2160
        %v2239 = vpop.f32.mrf.mxu0
        %v2240 = vadd.f32 %v2143, %v2239
        %v2241 = vpop.f32.mrf.mxu0
        %2242 = vmatprep.mubr.f32.mxu0 0.0
        %2243 = vmatmul.mubr.f32.gmra.mxu0 %v2163
        %v2244 = vpop.f32.mrf.mxu0
        %v2245 = vadd.f32 %v2148, %v2244
        %v2246 = vpop.f32.mrf.mxu0
        %2247 = vmatprep.mubr.f32.mxu0 0.0
        %2248 = vmatmul.mubr.f32.gmra.mxu0 %v2166
        %v2249 = vpop.f32.mrf.mxu0
        %v2250 = vadd.f32 %v2153, %v2249
        %v2251 = vpop.f32.mrf.mxu0
        %2252 = vdwg.mxu0
        %s2253 = smul.addr %s1150, 8
        %s2254 = scalar_lea.vmem %s351, %s2253 [#allocation6]
        %v2255 = vld [vmem:[%s2254] sm:$0xff]
        %v2256 = vld [vmem:[%s2254 + $0x10] sm:$0xff]
        %v2257 = vld [vmem:[%s2254 + $0x20] sm:$0xff]
        %v2258 = vld [vmem:[%s2254 + $0x30] sm:$0xff]
        %v2259 = vadd.f32 %v2235, %v2255
        %v2260 = vadd.f32 %v2240, %v2256
        %v2261 = vadd.f32 %v2245, %v2257
        %v2262 = vadd.f32 %v2250, %v2258
        %2263 = vst [vmem:[%s393] sm:$0xff] %v2259
        %2264 = vst [vmem:[%s393 + $0x8] sm:$0xff] %v2260
        %2265 = vst [vmem:[%s393 + $0x10] sm:$0xff] %v2261
        %2266 = vst [vmem:[%s393 + $0x18] sm:$0xff] %v2262
        %s2267 = sand.u32 %s243, 1
        %s2268 = scalar_lea.sflag [#allocation8], %s2267
        %s2269 = sand.u32 %s243, 1
        %s2270 = smul.addr %s2269, 32
        %s2271 = scalar_lea.vmem [#allocation12], %s2270
        // Predicated region
        $region73: #{tpu_custom_call.1} parent=55 // pred_check
          %p2272 = pneg %p253
        $region74: #{tpu_custom_call.1} parent=55 // pred_check_branch
          %2274 = sbr.rel (%p2272) target = $region76
        $region75: #{tpu_custom_call.1} parent=55 // pred_region
          %s2276 = ssub.s32 512, 512
          %2277 = vsyncadd %s2268, %s2276
          %s2278 = smul.addr %s31, 8
          %s2279 = sadd.s32 %s32, %s2278
          %s2280 = smul.addr %s2279, 128
          %s2281 = scalar_lea.hbm %s9, %s2280
          %s2282 = sshll.u32 %s2271, 4
          %s2283 = int_to_ptr.vmem [resolvable:$true] %s2282
          %2288 = dma.vmem_to_hbm [thread:$0]  %s2283, 512, %s2281, %s2268, 128, 256, 8
        $region76: #{tpu_custom_call.1} parent=55 // pred_fallthru
          _
      $region56: #{tpu_custom_call.1} parent=5 // pred_fallthru
        _
      %p2289 = scmp.le.s32.totalorder 2, %s22
      // Predicated region
      $region77: #{tpu_custom_call.1} parent=5 // pred_check
        %p2290 = pneg %p2289
      $region78: #{tpu_custom_call.1} parent=5 // pred_check_branch
        %2292 = sbr.rel (%p2290) target = $region80
      $region79: #{tpu_custom_call.1} parent=5 // pred_region
        %s2293 = ssub.s32 %s22, 2
        // Predicated region
        $region81: #{tpu_custom_call.1} parent=79 // pred_check
          %p2294 = pneg %p259
        $region82: #{tpu_custom_call.1} parent=79 // pred_check_branch
          %2296 = sbr.rel (%p2294) target = $region84
        $region83: #{tpu_custom_call.1} parent=79 // pred_region
          %s2297 = sand.u32 %s244, 1
          %s2298 = scalar_lea.sflag [#allocation8], %s2297
          %s2299 = sand.u32 %s244, 1
          %s2300 = smul.addr %s2299, 32
          %s2301 = scalar_lea.vmem [#allocation12], %s2300
          %2302 = dma.done %s2298, 512
        $region84: #{tpu_custom_call.1} parent=79 // pred_fallthru
          _
      $region80: #{tpu_custom_call.1} parent=5 // pred_fallthru
        _
    $region6: #{tpu_custom_call.1} parent=1 // loop_footer
      %s26 = sadd.s32 1, %s22
    $region7: #{tpu_custom_call.1} parent=1 // loop_footer_branch
      %21 = sbr.rel target = $region3
    $region8: #{tpu_custom_call.1} parent=1 // loop_exit
      _
    %2303 = vsyncpa [#allocation7], 1
    %s2304 = scalar_lea.sflag [#allocation7], 1
    %2305 = vsyncpa %s2304, 1
    %2306 = vsyncpa [#allocation10], 1
    %2307 = vsyncpa [#allocation8], 1
    %s2308 = scalar_lea.sflag [#allocation8], 1
    %2309 = vsyncpa %s2308, 1

</llo_original>
